<compile_context>
chip_gen: v7x
topology: tpu7x:2x2x1
jax: 0.10.0
libtpu: 0.0.40
codegen_flags: <defaults>
</compile_context>

<pallas_src>
import functools

import jax
import jax.numpy as jnp
from jax import lax
from jax.experimental import pallas as pl
from jax.experimental.pallas import tpu as pltpu

NF_PAD = 128    # conv output channels padded to one full 128-lane vreg per branch
C_PAD = 128     # classifier output padded to a full 128-lane vreg
T_CHUNK = 8     # sublane chunk size for the online max over conv windows
NEG_INF = -1e30  # finite sentinel (never -inf: avoids NaN through add/max)


def _round_up(x, m):
    return (x + m - 1) // m * m


def _textcnn_kernel(k_max, chunk_needs_mask,
                    emb_ref, w_ref, mask_ref, b_ref, fcw_ref, fcb_ref, out_ref):
    """One batch tile of the TextCNN forward.

    emb_ref : (B_TILE, L_PAD, E)      bf16  embedded, zero-padded tokens
    w_ref   : (k_max, E, NB*NF_PAD)   bf16  merged, lane-padded conv weights
    mask_ref: (T_PAD, NB*NF_PAD)      f32   0.0 for valid windows else -1e30
    b_ref   : (1, NB*NF_PAD)          f32   merged conv bias (zero in padding)
    fcw_ref : (NB*NF_PAD, C_PAD)      bf16  merged classifier weight
    fcb_ref : (1, C_PAD)              f32   classifier bias
    out_ref : (B_TILE, C_PAD)         f32   logits (padded classes stay 0)
    """
    nf_total = w_ref.shape[-1]
    w = w_ref[...]                                   # (k_max, E, nf_total), small

    def chunk_max(c):
        start = c * T_CHUNK
        # Conv2d(1, nf, (k, E)) for all branches at once: each tap dk is one
        # (Bt*T_CHUNK, E) x (E, NB*128) MXU matmul with f32 accumulation.
        # First tap assigns directly (no zeros init / extra full-tensor add).
        conv = lax.dot_general(
            emb_ref[:, start:start + T_CHUNK, :], w[0],
            dimension_numbers=(((2,), (0,)), ((), ())),
            preferred_element_type=jnp.float32)
        for dk in range(1, k_max):                   # static, unrolled
            # TODO(synk): if bundle dumps show sublane realignment copies for
            # these unaligned (start+dk) slices, switch to per-tap
            # pltpu.roll(emb, -dk, axis=1) shared across chunks (XLU is idle).
            conv = conv + lax.dot_general(
                emb_ref[:, start + dk:start + dk + T_CHUNK, :], w[dk],
                dimension_numbers=(((2,), (0,)), ((), ())),
                preferred_element_type=jnp.float32)
        if chunk_needs_mask[c]:
            # Additive -1e30 mask only on chunks containing padded /
            # partially-padded windows; fully valid chunks skip this VPU pass.
            conv = conv + mask_ref[start:start + T_CHUNK, :].reshape(
                1, T_CHUNK, nf_total)
        return jnp.max(conv, axis=1)                 # (Bt, nf_total)

    # Online max over time chunks: live data is one chunk intermediate plus the
    # (Bt, nf_total) running max -- no full (Bt, T_PAD, NF_TOTAL) accumulator.
    n_chunks = len(chunk_needs_mask)
    running = chunk_max(0)
    for c in range(1, n_chunks):                     # static loop; n_chunks small
        running = jnp.maximum(running, chunk_max(c))
    # TODO(synk): for very long sequences switch this loop to lax.fori_loop
    # (pl.ds chunk starts) to bound unrolled code size.

    # Fused epilogue on the tiny pooled tensor: + bias, ReLU; dropout(eval)=id.
    # ReLU(max_t(conv_t) + b) == max_t(ReLU(conv_t + b)) since ReLU is monotone
    # and every column has at least one valid window.
    pooled = jnp.maximum(running + b_ref[...], 0.0)

    # Pooled features already sit in concatenated-branch order, so one matmul
    # against the merged fc weight replaces torch.cat + Linear (padded channel
    # rows and padded class columns are zero).
    out_ref[...] = lax.dot_general(
        pooled.astype(fcw_ref.dtype), fcw_ref[...],
        dimension_numbers=(((1,), (0,)), ((), ())),
        preferred_element_type=jnp.float32) + fcb_ref[...]


def _vmem_limit_bytes():
    """Generation-aware VMEM budget (v5e/v6e: 128 MiB, v7x: 64 MiB per core)."""
    cap = 64 * 1024 * 1024                            # conservative (v7x-sized)
    try:
        cap = int(pltpu.get_tpu_info().vmem_capacity_bytes)
    except Exception:
        pass
    return int(min(cap * 3 // 4, 100 * 1024 * 1024))


def textcnn_forward(tokens, emb_table, conv_ws, conv_bs, fc_w, fc_b,
                    filter_sizes, *, compute_dtype=jnp.bfloat16):
    filter_sizes = tuple(int(k) for k in filter_sizes)
    nb = len(filter_sizes)
    k_max = max(filter_sizes)
    B, L = tokens.shape
    E = emb_table.shape[1]
    nf = conv_ws[0].shape[-1]
    C = fc_w.shape[1]

    t_pad = _round_up(L - min(filter_sizes) + 1, T_CHUNK)  # padded conv length
    l_pad = _round_up(t_pad + k_max - 1, 8)                # padded seq length
    nf_total = nb * NF_PAD
    n_chunks = t_pad // T_CHUNK

    # ---- one-time parameter prep: merge branches, pad channels/classes to 128.
    w_blocks, b_blocks, m_blocks, fc_blocks = [], [], [], []
    for i, k in enumerate(filter_sizes):
        w_blocks.append(jnp.pad(conv_ws[i],                       # (k, E, nf) ->
                                ((0, k_max - k), (0, 0), (0, NF_PAD - nf))))
        b_blocks.append(jnp.pad(conv_bs[i].reshape(1, nf),
                                ((0, 0), (0, NF_PAD - nf))))
        t_valid = L - k + 1
        m = jnp.where(jnp.arange(t_pad) < t_valid, 0.0, NEG_INF)
        m_blocks.append(jnp.broadcast_to(m[:, None].astype(jnp.float32),
                                         (t_pad, NF_PAD)))
        fc_blocks.append(jnp.pad(fc_w[i * nf:(i + 1) * nf, :],
                                 ((0, NF_PAD - nf), (0, C_PAD - C))))

    w_all = jnp.concatenate(w_blocks, axis=2).astype(compute_dtype)     # (k_max,E,NF)
    b_all = jnp.concatenate(b_blocks, axis=1).astype(jnp.float32)       # (1,NF)
    mask_add = jnp.concatenate(m_blocks, axis=1).astype(jnp.float32)    # (t_pad,NF)
    fcw_all = jnp.concatenate(fc_blocks, axis=0).astype(compute_dtype)  # (NF,C_PAD)
    fcb_pad = jnp.pad(fc_b.reshape(1, C),
                      ((0, 0), (0, C_PAD - C))).astype(jnp.float32)

    # A chunk only needs the additive mask if some branch has an invalid
    # (padded / partially-padded) window inside it -- statically known.
    min_t_valid = L - k_max + 1
    chunk_needs_mask = tuple((c + 1) * T_CHUNK > min_t_valid
                             for c in range(n_chunks))

    # ---- embedding lookup + activation padding (plain JAX glue).
    # TODO(synk): fuse this gather into the kernel (scalar-prefetched token ids
    # + per-row DMA, or a VMEM-resident table) so the (B, L, E) bf16 stream is
    # not written to and re-read from HBM.
    emb = jnp.take(emb_table, tokens.astype(jnp.int32), axis=0).astype(compute_dtype)

    # ---- generation-aware batch tiling from a VMEM budget.
    vmem_limit = _vmem_limit_bytes()
    invariant_bytes = 2 * (w_all.size * 2 + mask_add.size * 4 + b_all.size * 4
                           + fcw_all.size * 2 + fcb_pad.size * 4)
    bytes_per_row = (2 * l_pad * E * 2           # double-buffered bf16 emb stream
                     + T_CHUNK * nf_total * 4    # per-chunk conv intermediate
                     + 2 * nf_total * 4          # running max + pooled
                     + 2 * C_PAD * 4)            # double-buffered f32 logits
    budget = max(vmem_limit - invariant_bytes - (4 << 20), 8 * bytes_per_row)
    b_tile_target = max(8, min(256, (budget // bytes_per_row) // 8 * 8))

    b_ceil = _round_up(B, 8)
    num_tiles = max(1, -(-b_ceil // b_tile_target))
    if num_tiles == 1 and b_ceil >= 16:
        num_tiles = 2          # >= 2 grid steps so both v7x TensorCores get work
    b_tile = _round_up(-(-b_ceil // num_tiles), 8)
    b_padded = _round_up(b_ceil, b_tile)

    emb = jnp.pad(emb, ((0, b_padded - B), (0, l_pad - L), (0, 0)))
    grid = (b_padded // b_tile,)

    flops = (2 * b_padded * t_pad * E * nf_total * k_max
             + 2 * b_padded * nf_total * C_PAD)
    bytes_accessed = int(emb.size * 2 + w_all.size * 2 + fcw_all.size * 2
                         + (b_all.size + mask_add.size + fcb_pad.size) * 4
                         + b_padded * C_PAD * 4)

    # NOTE: the grid-invariant operands (conv w, mask, bias, fc w, fc b) total
    # <200 KB here, so their default double-buffering is negligible; switch
    # them to pipeline_mode=pl.Buffered(1) if the merged weights ever grow.
    out = pl.pallas_call(
        functools.partial(_textcnn_kernel, k_max, chunk_needs_mask),
        out_shape=jax.ShapeDtypeStruct((b_padded, C_PAD), jnp.float32),
        grid=grid,
        in_specs=[
            pl.BlockSpec((b_tile, l_pad, E), lambda i: (i, 0, 0)),      # emb (tiled)
            pl.BlockSpec((k_max, E, nf_total), lambda i: (0, 0, 0)),    # conv w
            pl.BlockSpec((t_pad, nf_total), lambda i: (0, 0)),          # additive mask
            pl.BlockSpec((1, nf_total), lambda i: (0, 0)),              # conv bias
            pl.BlockSpec((nf_total, C_PAD), lambda i: (0, 0)),          # fc w
            pl.BlockSpec((1, C_PAD), lambda i: (0, 0)),                 # fc b
        ],
        out_specs=pl.BlockSpec((b_tile, C_PAD), lambda i: (i, 0)),
        compiler_params=pltpu.CompilerParams(
            dimension_semantics=("parallel",),
            vmem_limit_bytes=vmem_limit),
        cost_estimate=pl.CostEstimate(
            flops=int(flops), transcendentals=0, bytes_accessed=bytes_accessed),
    )(emb, w_all, mask_add, b_all, fcw_all, fcb_pad)

    return out[:B, :C]


def textcnn_reference(tokens, emb_table, conv_ws, conv_bs, fc_w, fc_b,
                      filter_sizes):
    """Pure-jnp f32 reference mirroring the PyTorch forward (eval mode)."""
    emb = emb_table[tokens]                            # (B, L, E)
    B, L, E = emb.shape
    feats = []
    for w, b, k in zip(conv_ws, conv_bs, filter_sizes):
        T = L - k + 1
        acc = jnp.zeros((B, T, w.shape[-1]), jnp.float32)
        for dk in range(k):
            acc = acc + jnp.einsum('bte,ef->btf', emb[:, dk:dk + T, :], w[dk])
        acc = jnp.maximum(acc + b.reshape(1, 1, -1), 0.0)
        feats.append(jnp.max(acc, axis=1))
    feat = jnp.concatenate(feats, axis=1)
    return feat @ fc_w + fc_b


if __name__ == "__main__":
    VOCAB, EMBED, NUM_FILTERS = 50, 16, 8
    FILTER_SIZES = (2, 3, 4)
    NUM_CLASSES = 5
    B, L = 2, 12

    key = jax.random.PRNGKey(0)
    ks = jax.random.split(key, 3 + 2 * len(FILTER_SIZES))

    emb_table = jax.random.normal(ks[0], (VOCAB, EMBED), jnp.float32) * 0.1
    conv_ws, conv_bs = [], []
    for i, k in enumerate(FILTER_SIZES):
        conv_ws.append(jax.random.normal(ks[1 + 2 * i], (k, EMBED, NUM_FILTERS),
                                         jnp.float32) * 0.1)
        conv_bs.append(jax.random.normal(ks[2 + 2 * i], (1, NUM_FILTERS),
                                         jnp.float32) * 0.1)
    fc_w = jax.random.normal(ks[-2], (NUM_FILTERS * len(FILTER_SIZES), NUM_CLASSES),
                             jnp.float32) * 0.1
    fc_b = jnp.zeros((1, NUM_CLASSES), jnp.float32)
    tokens = jax.random.randint(ks[-1], (B, L), 0, VOCAB)

    logits = textcnn_forward(tokens, emb_table, conv_ws, conv_bs, fc_w, fc_b,
                             FILTER_SIZES)
    jax.block_until_ready(logits)

    ref = textcnn_reference(tokens, emb_table, conv_ws, conv_bs, fc_w, fc_b,
                            FILTER_SIZES)
    assert logits.shape == (B, NUM_CLASSES)
    # bf16 MXU inputs with f32 accumulation vs. pure-f32 reference.
    assert jnp.allclose(logits, ref, rtol=2e-2, atol=2e-2), (
        float(jnp.max(jnp.abs(logits - ref))))
    print("KERNEL_OK")
</pallas_src>

<mosaic_0001>
module attributes {stable_mosaic.version = 11 : i64} {
  func.func @_textcnn_kernel(%arg0: i32, %arg1: memref<8x24x16xbf16, #tpu.memory_space<vmem>>, %arg2: memref<4x16x384xbf16, #tpu.memory_space<vmem>>, %arg3: memref<16x384xf32, #tpu.memory_space<vmem>>, %arg4: memref<1x384xf32, #tpu.memory_space<vmem>>, %arg5: memref<384x128xbf16, #tpu.memory_space<vmem>>, %arg6: memref<1x128xf32, #tpu.memory_space<vmem>>, %arg7: memref<8x128xf32, #tpu.memory_space<vmem>>) attributes {dimension_semantics = [#tpu.dimension_semantics<parallel>], iteration_bounds = array<i64: 1>, scalar_prefetch = 0 : i64, scratch_operands = 0 : i64, tpu.core_type = #tpu.core_type<tc>, window_params = [{transform_indices = @transform_0, window_bounds = array<i64: 8, 24, 16>}, {pipeline_mode = #tpu.pipeline_mode<synchronous>, transform_indices = @transform_1, window_bounds = array<i64: 4, 16, 384>}, {pipeline_mode = #tpu.pipeline_mode<synchronous>, transform_indices = @transform_2, window_bounds = array<i64: 16, 384>}, {pipeline_mode = #tpu.pipeline_mode<synchronous>, transform_indices = @transform_3, window_bounds = array<i64: 1, 384>}, {pipeline_mode = #tpu.pipeline_mode<synchronous>, transform_indices = @transform_4, window_bounds = array<i64: 384, 128>}, {pipeline_mode = #tpu.pipeline_mode<synchronous>, transform_indices = @transform_5, window_bounds = array<i64: 1, 128>}, {transform_indices = @transform_6, window_bounds = array<i64: 8, 128>}]} {
    %c0 = arith.constant 0 : index
    %c0_0 = arith.constant 0 : index
    %c0_1 = arith.constant 0 : index
    %0 = vector.load %arg2[%c0, %c0_0, %c0_1] : memref<4x16x384xbf16, #tpu.memory_space<vmem>>, vector<4x16x384xbf16>
    %c0_2 = arith.constant 0 : index
    %c0_3 = arith.constant 0 : index
    %c0_4 = arith.constant 0 : index
    %1 = vector.load %arg1[%c0_2, %c0_3, %c0_4] : memref<8x24x16xbf16, #tpu.memory_space<vmem>>, vector<8x8x16xbf16>
    %2 = vector.extract_strided_slice %0 {offsets = [0, 0, 0], sizes = [1, 16, 384], strides = [1, 1, 1]} : vector<4x16x384xbf16> to vector<1x16x384xbf16>
    %3 = vector.shape_cast %2 : vector<1x16x384xbf16> to vector<16x384xbf16>
    %cst = arith.constant dense<0.000000e+00> : vector<8x8x384xf32>
    %4 = tpu.matmul %1, %3, %cst {dimension_numbers = #tpu.dot_dimension_numbers<[2], [0], [0, 1], [1], [0, 0, 0, 1, 1, 1], [], []>} : vector<8x8x16xbf16>, vector<16x384xbf16>, vector<8x8x384xf32> -> vector<8x8x384xf32>
    %c0_5 = arith.constant 0 : index
    %c1 = arith.constant 1 : index
    %c0_6 = arith.constant 0 : index
    %5 = vector.load %arg1[%c0_5, %c1, %c0_6] : memref<8x24x16xbf16, #tpu.memory_space<vmem>>, vector<8x8x16xbf16>
    %6 = vector.extract_strided_slice %0 {offsets = [1, 0, 0], sizes = [1, 16, 384], strides = [1, 1, 1]} : vector<4x16x384xbf16> to vector<1x16x384xbf16>
    %7 = vector.shape_cast %6 : vector<1x16x384xbf16> to vector<16x384xbf16>
    %cst_7 = arith.constant dense<0.000000e+00> : vector<8x8x384xf32>
    %8 = tpu.matmul %5, %7, %cst_7 {dimension_numbers = #tpu.dot_dimension_numbers<[2], [0], [0, 1], [1], [0, 0, 0, 1, 1, 1], [], []>} : vector<8x8x16xbf16>, vector<16x384xbf16>, vector<8x8x384xf32> -> vector<8x8x384xf32>
    %9 = arith.addf %4, %8 : vector<8x8x384xf32>
    %c0_8 = arith.constant 0 : index
    %c2 = arith.constant 2 : index
    %c0_9 = arith.constant 0 : index
    %10 = vector.load %arg1[%c0_8, %c2, %c0_9] : memref<8x24x16xbf16, #tpu.memory_space<vmem>>, vector<8x8x16xbf16>
    %11 = vector.extract_strided_slice %0 {offsets = [2, 0, 0], sizes = [1, 16, 384], strides = [1, 1, 1]} : vector<4x16x384xbf16> to vector<1x16x384xbf16>
    %12 = vector.shape_cast %11 : vector<1x16x384xbf16> to vector<16x384xbf16>
    %cst_10 = arith.constant dense<0.000000e+00> : vector<8x8x384xf32>
    %13 = tpu.matmul %10, %12, %cst_10 {dimension_numbers = #tpu.dot_dimension_numbers<[2], [0], [0, 1], [1], [0, 0, 0, 1, 1, 1], [], []>} : vector<8x8x16xbf16>, vector<16x384xbf16>, vector<8x8x384xf32> -> vector<8x8x384xf32>
    %14 = arith.addf %9, %13 : vector<8x8x384xf32>
    %c0_11 = arith.constant 0 : index
    %c3 = arith.constant 3 : index
    %c0_12 = arith.constant 0 : index
    %15 = vector.load %arg1[%c0_11, %c3, %c0_12] : memref<8x24x16xbf16, #tpu.memory_space<vmem>>, vector<8x8x16xbf16>
    %16 = vector.extract_strided_slice %0 {offsets = [3, 0, 0], sizes = [1, 16, 384], strides = [1, 1, 1]} : vector<4x16x384xbf16> to vector<1x16x384xbf16>
    %17 = vector.shape_cast %16 : vector<1x16x384xbf16> to vector<16x384xbf16>
    %cst_13 = arith.constant dense<0.000000e+00> : vector<8x8x384xf32>
    %18 = tpu.matmul %15, %17, %cst_13 {dimension_numbers = #tpu.dot_dimension_numbers<[2], [0], [0, 1], [1], [0, 0, 0, 1, 1, 1], [], []>} : vector<8x8x16xbf16>, vector<16x384xbf16>, vector<8x8x384xf32> -> vector<8x8x384xf32>
    %19 = arith.addf %14, %18 : vector<8x8x384xf32>
    %cst_14 = arith.constant dense<0xFF800000> : vector<8x384xf32>
    %20 = vector.multi_reduction <maximumf>, %19, %cst_14 [1] : vector<8x8x384xf32> to vector<8x384xf32>
    %c0_15 = arith.constant 0 : index
    %c8 = arith.constant 8 : index
    %c0_16 = arith.constant 0 : index
    %21 = vector.load %arg1[%c0_15, %c8, %c0_16] : memref<8x24x16xbf16, #tpu.memory_space<vmem>>, vector<8x8x16xbf16>
    %22 = vector.extract_strided_slice %0 {offsets = [0, 0, 0], sizes = [1, 16, 384], strides = [1, 1, 1]} : vector<4x16x384xbf16> to vector<1x16x384xbf16>
    %23 = vector.shape_cast %22 : vector<1x16x384xbf16> to vector<16x384xbf16>
    %cst_17 = arith.constant dense<0.000000e+00> : vector<8x8x384xf32>
    %24 = tpu.matmul %21, %23, %cst_17 {dimension_numbers = #tpu.dot_dimension_numbers<[2], [0], [0, 1], [1], [0, 0, 0, 1, 1, 1], [], []>} : vector<8x8x16xbf16>, vector<16x384xbf16>, vector<8x8x384xf32> -> vector<8x8x384xf32>
    %c0_18 = arith.constant 0 : index
    %c9 = arith.constant 9 : index
    %c0_19 = arith.constant 0 : index
    %25 = vector.load %arg1[%c0_18, %c9, %c0_19] : memref<8x24x16xbf16, #tpu.memory_space<vmem>>, vector<8x8x16xbf16>
    %26 = vector.extract_strided_slice %0 {offsets = [1, 0, 0], sizes = [1, 16, 384], strides = [1, 1, 1]} : vector<4x16x384xbf16> to vector<1x16x384xbf16>
    %27 = vector.shape_cast %26 : vector<1x16x384xbf16> to vector<16x384xbf16>
    %cst_20 = arith.constant dense<0.000000e+00> : vector<8x8x384xf32>
    %28 = tpu.matmul %25, %27, %cst_20 {dimension_numbers = #tpu.dot_dimension_numbers<[2], [0], [0, 1], [1], [0, 0, 0, 1, 1, 1], [], []>} : vector<8x8x16xbf16>, vector<16x384xbf16>, vector<8x8x384xf32> -> vector<8x8x384xf32>
    %29 = arith.addf %24, %28 : vector<8x8x384xf32>
    %c0_21 = arith.constant 0 : index
    %c10 = arith.constant 10 : index
    %c0_22 = arith.constant 0 : index
    %30 = vector.load %arg1[%c0_21, %c10, %c0_22] : memref<8x24x16xbf16, #tpu.memory_space<vmem>>, vector<8x8x16xbf16>
    %31 = vector.extract_strided_slice %0 {offsets = [2, 0, 0], sizes = [1, 16, 384], strides = [1, 1, 1]} : vector<4x16x384xbf16> to vector<1x16x384xbf16>
    %32 = vector.shape_cast %31 : vector<1x16x384xbf16> to vector<16x384xbf16>
    %cst_23 = arith.constant dense<0.000000e+00> : vector<8x8x384xf32>
    %33 = tpu.matmul %30, %32, %cst_23 {dimension_numbers = #tpu.dot_dimension_numbers<[2], [0], [0, 1], [1], [0, 0, 0, 1, 1, 1], [], []>} : vector<8x8x16xbf16>, vector<16x384xbf16>, vector<8x8x384xf32> -> vector<8x8x384xf32>
    %34 = arith.addf %29, %33 : vector<8x8x384xf32>
    %c0_24 = arith.constant 0 : index
    %c11 = arith.constant 11 : index
    %c0_25 = arith.constant 0 : index
    %35 = vector.load %arg1[%c0_24, %c11, %c0_25] : memref<8x24x16xbf16, #tpu.memory_space<vmem>>, vector<8x8x16xbf16>
    %36 = vector.extract_strided_slice %0 {offsets = [3, 0, 0], sizes = [1, 16, 384], strides = [1, 1, 1]} : vector<4x16x384xbf16> to vector<1x16x384xbf16>
    %37 = vector.shape_cast %36 : vector<1x16x384xbf16> to vector<16x384xbf16>
    %cst_26 = arith.constant dense<0.000000e+00> : vector<8x8x384xf32>
    %38 = tpu.matmul %35, %37, %cst_26 {dimension_numbers = #tpu.dot_dimension_numbers<[2], [0], [0, 1], [1], [0, 0, 0, 1, 1, 1], [], []>} : vector<8x8x16xbf16>, vector<16x384xbf16>, vector<8x8x384xf32> -> vector<8x8x384xf32>
    %39 = arith.addf %34, %38 : vector<8x8x384xf32>
    %c8_27 = arith.constant 8 : index
    %c0_28 = arith.constant 0 : index
    %40 = vector.load %arg3[%c8_27, %c0_28] : memref<16x384xf32, #tpu.memory_space<vmem>>, vector<8x384xf32>
    %41 = vector.shape_cast %40 : vector<8x384xf32> to vector<1x8x384xf32>
    %42 = vector.broadcast %41 : vector<1x8x384xf32> to vector<8x8x384xf32>
    %43 = arith.addf %39, %42 : vector<8x8x384xf32>
    %cst_29 = arith.constant dense<0xFF800000> : vector<8x384xf32>
    %44 = vector.multi_reduction <maximumf>, %43, %cst_29 [1] : vector<8x8x384xf32> to vector<8x384xf32>
    %45 = arith.maximumf %20, %44 : vector<8x384xf32>
    %c0_30 = arith.constant 0 : index
    %c0_31 = arith.constant 0 : index
    %46 = vector.load %arg4[%c0_30, %c0_31] : memref<1x384xf32, #tpu.memory_space<vmem>>, vector<1x384xf32>
    %47 = vector.broadcast %46 : vector<1x384xf32> to vector<8x384xf32>
    %48 = arith.addf %45, %47 : vector<8x384xf32>
    %cst_32 = arith.constant 0.000000e+00 : f32
    %49 = vector.broadcast %cst_32 : f32 to vector<8x384xf32>
    %50 = arith.maximumf %48, %49 : vector<8x384xf32>
    %51 = arith.truncf %50 : vector<8x384xf32> to vector<8x384xbf16>
    %c0_33 = arith.constant 0 : index
    %c0_34 = arith.constant 0 : index
    %52 = vector.load %arg5[%c0_33, %c0_34] : memref<384x128xbf16, #tpu.memory_space<vmem>>, vector<384x128xbf16>
    %cst_35 = arith.constant dense<0.000000e+00> : vector<8x128xf32>
    %53 = tpu.matmul %51, %52, %cst_35 {dimension_numbers = #tpu.dot_dimension_numbers<[1], [0], [0], [1], [0, 0, 1, 1], [], []>} : vector<8x384xbf16>, vector<384x128xbf16>, vector<8x128xf32> -> vector<8x128xf32>
    %c0_36 = arith.constant 0 : index
    %c0_37 = arith.constant 0 : index
    %54 = vector.load %arg6[%c0_36, %c0_37] : memref<1x128xf32, #tpu.memory_space<vmem>>, vector<1x128xf32>
    %55 = vector.broadcast %54 : vector<1x128xf32> to vector<8x128xf32>
    %56 = arith.addf %53, %55 : vector<8x128xf32>
    %c0_38 = arith.constant 0 : index
    %c0_39 = arith.constant 0 : index
    %57 = vector.load %arg7[%c0_38, %c0_39] : memref<8x128xf32, #tpu.memory_space<vmem>>, vector<8x128xf32>
    tpu.vector_store %arg7[%c0_38, %c0_39], %56 {strides = array<i32>} : memref<8x128xf32, #tpu.memory_space<vmem>>, vector<8x128xf32>,
    return
  }
  func.func @transform_0(%arg0: i32) -> (i32, i32, i32) {
    %c0_i32 = arith.constant 0 : i32
    %c0_i32_0 = arith.constant 0 : i32
    %c0_i32_1 = arith.constant 0 : i32
    return %arg0, %c0_i32, %c0_i32_0 : i32, i32, i32
  }
  func.func @transform_1(%arg0: i32) -> (i32, i32, i32) {
    %c0_i32 = arith.constant 0 : i32
    %c0_i32_0 = arith.constant 0 : i32
    %c0_i32_1 = arith.constant 0 : i32
    %c0_i32_2 = arith.constant 0 : i32
    return %c0_i32, %c0_i32_0, %c0_i32_1 : i32, i32, i32
  }
  func.func @transform_2(%arg0: i32) -> (i32, i32) {
    %c0_i32 = arith.constant 0 : i32
    %c0_i32_0 = arith.constant 0 : i32
    %c0_i32_1 = arith.constant 0 : i32
    return %c0_i32, %c0_i32_0 : i32, i32
  }
  func.func @transform_3(%arg0: i32) -> (i32, i32) {
    %c0_i32 = arith.constant 0 : i32
    %c0_i32_0 = arith.constant 0 : i32
    %c0_i32_1 = arith.constant 0 : i32
    return %c0_i32, %c0_i32_0 : i32, i32
  }
  func.func @transform_4(%arg0: i32) -> (i32, i32) {
    %c0_i32 = arith.constant 0 : i32
    %c0_i32_0 = arith.constant 0 : i32
    %c0_i32_1 = arith.constant 0 : i32
    return %c0_i32, %c0_i32_0 : i32, i32
  }
  func.func @transform_5(%arg0: i32) -> (i32, i32) {
    %c0_i32 = arith.constant 0 : i32
    %c0_i32_0 = arith.constant 0 : i32
    %c0_i32_1 = arith.constant 0 : i32
    return %c0_i32, %c0_i32_0 : i32, i32
  }
  func.func @transform_6(%arg0: i32) -> (i32, i32) {
    %c0_i32 = arith.constant 0 : i32
    %c0_i32_0 = arith.constant 0 : i32
    return %arg0, %c0_i32 : i32, i32
  }
}

</mosaic_0001>

<llo_original>
// kernel: tpu_custom_call.1
$region0: #{tpu_custom_call.1}
  #allocation0 [shape = 'u32[]', space=smem, size = 0x4, offset = 0x4, fixed_abs, tag = 'smem constant byte address 0x4 - core index']
  #allocation1 [shape = 'u32[144,128]{1,0:T(1,128)}', space=vmem, size = 0x12000, scoped, tag = 'internal scratch']
  %s0 = inlined_call_operand.vmem [shape: bf16[8,24,16], index: 0, kind: input, shape index: {}]
  %s1 = inlined_call_operand.vmem [shape: bf16[4,16,384], index: 1, kind: input, shape index: {}]
  %s2 = inlined_call_operand.vmem [shape: f32[16,384], index: 2, kind: input, shape index: {}]
  %s3 = inlined_call_operand.vmem [shape: f32[1,384], index: 3, kind: input, shape index: {}]
  %s4 = inlined_call_operand.hbm [shape: bf16[384,128], index: 4, kind: input, shape index: {}]
  %s5 = inlined_call_operand.vmem [shape: f32[1,128], index: 5, kind: input, shape index: {}]
  %s6 = inlined_call_operand.hbm [shape: f32[8,128], index: 6, kind: output, shape index: {}]
  %s7 = sld [smem:[#allocation0]]
  $region38: #{tpu_custom_call.1} parent=0
    _
  %s9 = ssub.s32 1, %s7
  %s10 = scalar_select 0, %s9, %s7
  $region1: #{tpu_custom_call.1} parent=0
    #allocation2 [shape = 'u8[98304]{0}', space=vmem, size = 0x18000, scoped, tag = 'input window, operand 4, single buffered']
    #allocation3 [shape = 's32[1]{0}', space=sflag, size = 0x4, scoped, tag = 'scoped memory for tpu_custom_call.1']
    #allocation4 [shape = 's32[1]{0}', space=sflag, size = 0x4, scoped, tag = 'scoped memory for tpu_custom_call.1']
    #allocation5 [shape = 'u8[4096]{0}', space=vmem, size = 0x1000, scoped, tag = 'output window, operand 0, single buffered']
    %11 = vsyncpa [#allocation3], 0
    %12 = vsyncpa [#allocation4], 0
    // Predicated region
    $region2: #{tpu_custom_call.1} parent=1 // pred_check
      _
    $region3: #{tpu_custom_call.1} parent=1 // pred_check_branch
      %14 = sbr.rel (0) target = $region5
    $region4: #{tpu_custom_call.1} parent=1 // pred_region
      _
    $region5: #{tpu_custom_call.1} parent=1 // pred_fallthru
      _
    // Predicated region
    $region6: #{tpu_custom_call.1} parent=1 // pred_check
      _
    $region7: #{tpu_custom_call.1} parent=1 // pred_check_branch
      %16 = sbr.rel (0) target = $region9
    $region8: #{tpu_custom_call.1} parent=1 // pred_region
      _
    $region9: #{tpu_custom_call.1} parent=1 // pred_fallthru
      _
    // Predicated region
    $region10: #{tpu_custom_call.1} parent=1 // pred_check
      _
    $region11: #{tpu_custom_call.1} parent=1 // pred_check_branch
      %18 = sbr.rel (0) target = $region13
    $region12: #{tpu_custom_call.1} parent=1 // pred_region
      _
    $region13: #{tpu_custom_call.1} parent=1 // pred_fallthru
      _
    // Predicated region
    $region14: #{tpu_custom_call.1} parent=1 // pred_check
      _
    $region15: #{tpu_custom_call.1} parent=1 // pred_check_branch
      %20 = sbr.rel (0) target = $region17
    $region16: #{tpu_custom_call.1} parent=1 // pred_region
      _
    $region17: #{tpu_custom_call.1} parent=1 // pred_fallthru
      _
    // Predicated region
    $region18: #{tpu_custom_call.1} parent=1 // pred_check
      _
    $region19: #{tpu_custom_call.1} parent=1 // pred_check_branch
      %22 = sbr.rel (0) target = $region21
    $region20: #{tpu_custom_call.1} parent=1 // pred_region
      %s24 = ssub.s32 3072, 3072
      %25 = vsyncadd [#allocation3], %s24
      %s26 = sshll.u32 [#allocation2], 4
      %s27 = int_to_ptr.vmem [resolvable:$true] %s26
      %32 = dma.hbm_to_vmem [thread:$0]  %s4, 3072, %s27, [#allocation3], 64, 64, 4
    $region21: #{tpu_custom_call.1} parent=1 // pred_fallthru
      _
    // Predicated region
    $region22: #{tpu_custom_call.1} parent=1 // pred_check
      _
    $region23: #{tpu_custom_call.1} parent=1 // pred_check_branch
      %34 = sbr.rel (0) target = $region25
    $region24: #{tpu_custom_call.1} parent=1 // pred_region
      _
    $region25: #{tpu_custom_call.1} parent=1 // pred_fallthru
      _
    // Predicated region
    $region26: #{tpu_custom_call.1} parent=1 // pred_check
      _
    $region27: #{tpu_custom_call.1} parent=1 // pred_check_branch
      %36 = sbr.rel (0) target = $region29
    $region28: #{tpu_custom_call.1} parent=1 // pred_region
      %37 = dma.done [#allocation3], 3072
    $region29: #{tpu_custom_call.1} parent=1 // pred_fallthru
      _
    %v39 = vld [vmem:[%s1] sm:$0xff]
    %v40 = vld [vmem:[%s1 + $0x8] sm:$0xf]
    %v41 = vld [vmem:[%s1 + $0xc] sm:$0xff]
    %v42 = vld [vmem:[%s1 + $0x14] sm:$0xf]
    %v43 = vld [vmem:[%s1 + $0x18] sm:$0xff]
    %v44 = vld [vmem:[%s1 + $0x20] sm:$0xf]
    %v45 = vld [vmem:[%s1 + $0x24] sm:$0xff]
    %v46 = vld [vmem:[%s1 + $0x2c] sm:$0xf]
    %v47 = vld [vmem:[%s1 + $0x30] sm:$0xff]
    %v48 = vld [vmem:[%s1 + $0x38] sm:$0xf]
    %v49 = vld [vmem:[%s1 + $0x3c] sm:$0xff]
    %v50 = vld [vmem:[%s1 + $0x44] sm:$0xf]
    %v51 = vld [vmem:[%s1 + $0x48] sm:$0xff]
    %v52 = vld [vmem:[%s1 + $0x50] sm:$0xf]
    %v53 = vld [vmem:[%s1 + $0x54] sm:$0xff]
    %v54 = vld [vmem:[%s1 + $0x5c] sm:$0xf]
    %v55 = vld [vmem:[%s0] sm:$0xf]
    %v56 = vld [vmem:[%s0 + $0xc] sm:$0xf]
    %v57 = vld [vmem:[%s0 + $0x18] sm:$0xf]
    %v58 = vld [vmem:[%s0 + $0x24] sm:$0xf]
    %v59 = vld [vmem:[%s0 + $0x30] sm:$0xf]
    %v60 = vld [vmem:[%s0 + $0x3c] sm:$0xf]
    %v61 = vld [vmem:[%s0 + $0x48] sm:$0xf]
    %v62 = vld [vmem:[%s0 + $0x54] sm:$0xf]
    %v63 = vld [vmem:[%s0 + $0x4] sm:$0x1]
    %v64 = vld [vmem:[%s0 + $0x10] sm:$0x1]
    %v65 = vld [vmem:[%s0 + $0x1c] sm:$0x1]
    %v66 = vld [vmem:[%s0 + $0x28] sm:$0x1]
    %v67 = vld [vmem:[%s0 + $0x34] sm:$0x1]
    %v68 = vld [vmem:[%s0 + $0x40] sm:$0x1]
    %v69 = vld [vmem:[%s0 + $0x4c] sm:$0x1]
    %v70 = vld [vmem:[%s0 + $0x58] sm:$0x1]
    %vm71 = vsmask.f32 3328
    %vm72 = vsmask.f32 7440
    %vm73 = vmor %vm71, %vm72
    %v75 = vshrl.u32 %v55, 16
    %v77 = vrot.slane %v75, 4
    %v78 = vshll.u32 %v55, 16
    %v80 = vrot.slane %v78, 5
    %v81 = vor.u32 %v77, %v80
    %v82 = vrot.slane %v81, 4
    %v84 = vshll.u32 %v63, 16
    %v86 = vrot.slane %v84, 5
    %v87 = vsel %vm73, %v82, %v86
    %v89 = vshrl.u32 %v56, 16
    %v91 = vrot.slane %v89, 4
    %v92 = vshll.u32 %v56, 16
    %v94 = vrot.slane %v92, 5
    %v95 = vor.u32 %v91, %v94
    %v96 = vrot.slane %v95, 4
    %v98 = vshll.u32 %v64, 16
    %v100 = vrot.slane %v98, 5
    %v101 = vsel %vm73, %v96, %v100
    %v103 = vshrl.u32 %v57, 16
    %v105 = vrot.slane %v103, 4
    %v106 = vshll.u32 %v57, 16
    %v108 = vrot.slane %v106, 5
    %v109 = vor.u32 %v105, %v108
    %v110 = vrot.slane %v109, 4
    %v112 = vshll.u32 %v65, 16
    %v114 = vrot.slane %v112, 5
    %v115 = vsel %vm73, %v110, %v114
    %v117 = vshrl.u32 %v58, 16
    %v119 = vrot.slane %v117, 4
    %v120 = vshll.u32 %v58, 16
    %v122 = vrot.slane %v120, 5
    %v123 = vor.u32 %v119, %v122
    %v124 = vrot.slane %v123, 4
    %v126 = vshll.u32 %v66, 16
    %v128 = vrot.slane %v126, 5
    %v129 = vsel %vm73, %v124, %v128
    %v131 = vshrl.u32 %v59, 16
    %v133 = vrot.slane %v131, 4
    %v134 = vshll.u32 %v59, 16
    %v136 = vrot.slane %v134, 5
    %v137 = vor.u32 %v133, %v136
    %v138 = vrot.slane %v137, 4
    %v140 = vshll.u32 %v67, 16
    %v142 = vrot.slane %v140, 5
    %v143 = vsel %vm73, %v138, %v142
    %v145 = vshrl.u32 %v60, 16
    %v147 = vrot.slane %v145, 4
    %v148 = vshll.u32 %v60, 16
    %v150 = vrot.slane %v148, 5
    %v151 = vor.u32 %v147, %v150
    %v152 = vrot.slane %v151, 4
    %v154 = vshll.u32 %v68, 16
    %v156 = vrot.slane %v154, 5
    %v157 = vsel %vm73, %v152, %v156
    %v159 = vshrl.u32 %v61, 16
    %v161 = vrot.slane %v159, 4
    %v162 = vshll.u32 %v61, 16
    %v164 = vrot.slane %v162, 5
    %v165 = vor.u32 %v161, %v164
    %v166 = vrot.slane %v165, 4
    %v168 = vshll.u32 %v69, 16
    %v170 = vrot.slane %v168, 5
    %v171 = vsel %vm73, %v166, %v170
    %v173 = vshrl.u32 %v62, 16
    %v175 = vrot.slane %v173, 4
    %v176 = vshll.u32 %v62, 16
    %v178 = vrot.slane %v176, 5
    %v179 = vor.u32 %v175, %v178
    %v180 = vrot.slane %v179, 4
    %v182 = vshll.u32 %v70, 16
    %v184 = vrot.slane %v182, 5
    %v185 = vsel %vm73, %v180, %v184
    %v186 = vunpack.c.l.b16 %v87
    %v187 = vunpack.c.l.b16 %v101
    %v188 = vunpack.c.l.b16 %v115
    %v189 = vunpack.c.l.b16 %v129
    %v190 = vunpack.c.l.b16 %v143
    %v191 = vunpack.c.l.b16 %v157
    %v192 = vunpack.c.l.b16 %v171
    %v193 = vunpack.c.l.b16 %v185
    %v194 = vpack.c.b16 %v187, %v186
    %v195 = vpack.c.b16 %v189, %v188
    %v196 = vpack.c.b16 %v191, %v190
    %v197 = vpack.c.b16 %v193, %v192
    %v202 = vunpack.c.l.b16 %v43
    %v203 = vunpack.c.h.b16 %v43
    %v204 = vunpack.c.l.b16 %v44
    %v205 = vunpack.c.l.b16 %v45
    %v206 = vunpack.c.h.b16 %v45
    %v207 = vunpack.c.l.b16 %v46
    %v208 = vpack.c.b16 %v205, %v202
    %v209 = vpack.c.b16 %v206, %v203
    %v210 = vpack.c.b16 %v207, %v204
    %vm214 = vcmask 130048
    %v216 = vsel %vm214, %v194, 0
    %v219 = vsel %vm214, %v195, 0
    %v222 = vsel %vm214, %v196, 0
    %v225 = vsel %vm214, %v197, 0
    %227 = vmatprep.subr.bf16.mxu0 %v209
    %228 = vmatpush1.bf16.msra.mxu0 %v208
    %229 = vmatprep.subr.bf16.mxu0 0
    %230 = vmatpush1.bf16.msra.mxu0 0
    %231 = vmatprep.subr.bf16.mxu0 0
    %232 = vmatpush1.bf16.msra.mxu0 0
    %233 = vmatprep.subr.bf16.mxu0 0
    %234 = vmatpush1.bf16.msra.mxu0 0
    %235 = vmatprep.subr.bf16.mxu0 0
    %236 = vmatpush1.bf16.msra.mxu0 0
    %237 = vmatprep.subr.bf16.mxu0 0
    %238 = vmatpush1.bf16.msra.mxu0 0
    %239 = vmatprep.subr.bf16.mxu0 0
    %240 = vmatpush1.bf16.msra.mxu0 0
    %241 = vmatprep.subr.bf16.mxu0 0
    %242 = vmatpush1.bf16.msra.mxu0 0
    %243 = vmatprep.subr.bf16.mxu0 0
    %244 = vmatpush1.bf16.msra.mxu0 0
    %245 = vmatprep.subr.bf16.mxu0 0
    %246 = vmatpush1.bf16.msra.mxu0 0
    %247 = vmatprep.subr.bf16.mxu0 0
    %248 = vmatpush1.bf16.msra.mxu0 0
    %249 = vmatprep.subr.bf16.mxu0 0
    %250 = vmatpush1.bf16.msra.mxu0 0
    %251 = vmatprep.subr.bf16.mxu0 0
    %252 = vmatpush1.bf16.msra.mxu0 0
    %253 = vmatprep.subr.bf16.mxu0 0
    %254 = vmatpush1.bf16.msra.mxu0 0
    %255 = vmatprep.subr.bf16.mxu0 0
    %256 = vmatpush1.bf16.msra.mxu0 0
    %257 = vmatprep.subr.bf16.mxu0 0
    %258 = vmatpush1.bf16.msra.mxu0 0
    %259 = vmatprep.mubr.bf16.mxu0 0
    %260 = vmatmul.mubr.bf16.gmra.mrb[0].mxu0 %v216
    %v261 = vpop.f32.mrb[0].mxu0
    %v262 = vadd.f32 0.0, %v261
    %v263 = vpop.f32.mrb[0].mxu0
    %v264 = vadd.f32 0.0, %v263
    %v265 = vpop.f32.mrb[0].mxu0
    %v266 = vadd.f32 0.0, %v265
    %v267 = vpop.f32.mrb[0].mxu0
    %v268 = vadd.f32 0.0, %v267
    %269 = vmatprep.mubr.bf16.mxu0 0
    %270 = vmatmul.mubr.bf16.gmra.mrb[0].mxu0 %v219
    %v271 = vpop.f32.mrb[0].mxu0
    %v272 = vadd.f32 0.0, %v271
    %v273 = vpop.f32.mrb[0].mxu0
    %v274 = vadd.f32 0.0, %v273
    %v275 = vpop.f32.mrb[0].mxu0
    %v276 = vadd.f32 0.0, %v275
    %v277 = vpop.f32.mrb[0].mxu0
    %v278 = vadd.f32 0.0, %v277
    %279 = vmatprep.mubr.bf16.mxu0 0
    %280 = vmatmul.mubr.bf16.gmra.mrb[0].mxu0 %v222
    %v281 = vpop.f32.mrb[0].mxu0
    %v282 = vadd.f32 0.0, %v281
    %v283 = vpop.f32.mrb[0].mxu0
    %v284 = vadd.f32 0.0, %v283
    %v285 = vpop.f32.mrb[0].mxu0
    %v286 = vadd.f32 0.0, %v285
    %v287 = vpop.f32.mrb[0].mxu0
    %v288 = vadd.f32 0.0, %v287
    %289 = vmatprep.mubr.bf16.mxu0 0
    %290 = vmatmul.mubr.bf16.gmra.mrb[0].mxu0 %v225
    %v291 = vpop.f32.mrb[0].mxu0
    %v292 = vadd.f32 0.0, %v291
    %v293 = vpop.f32.mrb[0].mxu0
    %v294 = vadd.f32 0.0, %v293
    %v295 = vpop.f32.mrb[0].mxu0
    %v296 = vadd.f32 0.0, %v295
    %v297 = vpop.f32.mrb[0].mxu0
    %v298 = vadd.f32 0.0, %v297
    %299 = vdwg.mxu0
    %300 = vmatprep.subr.bf16.mxu0 0
    %301 = vmatpush1.bf16.msra.mxu0 %v210
    %302 = vmatprep.subr.bf16.mxu0 0
    %303 = vmatpush1.bf16.msra.mxu0 0
    %304 = vmatprep.subr.bf16.mxu0 0
    %305 = vmatpush1.bf16.msra.mxu0 0
    %306 = vmatprep.subr.bf16.mxu0 0
    %307 = vmatpush1.bf16.msra.mxu0 0
    %308 = vmatprep.subr.bf16.mxu0 0
    %309 = vmatpush1.bf16.msra.mxu0 0
    %310 = vmatprep.subr.bf16.mxu0 0
    %311 = vmatpush1.bf16.msra.mxu0 0
    %312 = vmatprep.subr.bf16.mxu0 0
    %313 = vmatpush1.bf16.msra.mxu0 0
    %314 = vmatprep.subr.bf16.mxu0 0
    %315 = vmatpush1.bf16.msra.mxu0 0
    %316 = vmatprep.subr.bf16.mxu0 0
    %317 = vmatpush1.bf16.msra.mxu0 0
    %318 = vmatprep.subr.bf16.mxu0 0
    %319 = vmatpush1.bf16.msra.mxu0 0
    %320 = vmatprep.subr.bf16.mxu0 0
    %321 = vmatpush1.bf16.msra.mxu0 0
    %322 = vmatprep.subr.bf16.mxu0 0
    %323 = vmatpush1.bf16.msra.mxu0 0
    %324 = vmatprep.subr.bf16.mxu0 0
    %325 = vmatpush1.bf16.msra.mxu0 0
    %326 = vmatprep.subr.bf16.mxu0 0
    %327 = vmatpush1.bf16.msra.mxu0 0
    %328 = vmatprep.subr.bf16.mxu0 0
    %329 = vmatpush1.bf16.msra.mxu0 0
    %330 = vmatprep.subr.bf16.mxu0 0
    %331 = vmatpush1.bf16.msra.mxu0 0
    %332 = vmatprep.mubr.bf16.mxu0 0
    %333 = vmatmul.mubr.bf16.gmra.mrb[0].mxu0 %v216
    %v334 = vpop.f32.mrb[0].mxu0
    %v335 = vadd.f32 0.0, %v334
    %v336 = vpop.f32.mrb[0].mxu0
    %v337 = vpop.f32.mrb[0].mxu0
    %v338 = vadd.f32 0.0, %v337
    %v339 = vpop.f32.mrb[0].mxu0
    %340 = vmatprep.mubr.bf16.mxu0 0
    %341 = vmatmul.mubr.bf16.gmra.mrb[0].mxu0 %v219
    %v342 = vpop.f32.mrb[0].mxu0
    %v343 = vadd.f32 0.0, %v342
    %v344 = vpop.f32.mrb[0].mxu0
    %v345 = vpop.f32.mrb[0].mxu0
    %v346 = vadd.f32 0.0, %v345
    %v347 = vpop.f32.mrb[0].mxu0
    %348 = vmatprep.mubr.bf16.mxu0 0
    %349 = vmatmul.mubr.bf16.gmra.mrb[0].mxu0 %v222
    %v350 = vpop.f32.mrb[0].mxu0
    %v351 = vadd.f32 0.0, %v350
    %v352 = vpop.f32.mrb[0].mxu0
    %v353 = vpop.f32.mrb[0].mxu0
    %v354 = vadd.f32 0.0, %v353
    %v355 = vpop.f32.mrb[0].mxu0
    %356 = vmatprep.mubr.bf16.mxu0 0
    %357 = vmatmul.mubr.bf16.gmra.mrb[0].mxu0 %v225
    %v358 = vpop.f32.mrb[0].mxu0
    %v359 = vadd.f32 0.0, %v358
    %v360 = vpop.f32.mrb[0].mxu0
    %v361 = vpop.f32.mrb[0].mxu0
    %v362 = vadd.f32 0.0, %v361
    %v363 = vpop.f32.mrb[0].mxu0
    %364 = vdwg.mxu0
    %v373 = vunpack.c.l.b16 %v55
    %v374 = vunpack.c.l.b16 %v56
    %v375 = vunpack.c.l.b16 %v57
    %v376 = vunpack.c.l.b16 %v58
    %v377 = vunpack.c.l.b16 %v59
    %v378 = vunpack.c.l.b16 %v60
    %v379 = vunpack.c.l.b16 %v61
    %v380 = vunpack.c.l.b16 %v62
    %v381 = vpack.c.b16 %v374, %v373
    %v382 = vpack.c.b16 %v376, %v375
    %v383 = vpack.c.b16 %v378, %v377
    %v384 = vpack.c.b16 %v380, %v379
    %v389 = vunpack.c.l.b16 %v39
    %v390 = vunpack.c.h.b16 %v39
    %v391 = vunpack.c.l.b16 %v40
    %v392 = vunpack.c.l.b16 %v41
    %v393 = vunpack.c.h.b16 %v41
    %v394 = vunpack.c.l.b16 %v42
    %v395 = vpack.c.b16 %v392, %v389
    %v396 = vpack.c.b16 %v393, %v390
    %v397 = vpack.c.b16 %v394, %v391
    %v402 = vsel %vm214, %v381, 0
    %v405 = vsel %vm214, %v382, 0
    %v408 = vsel %vm214, %v383, 0
    %v411 = vsel %vm214, %v384, 0
    %413 = vmatprep.subr.bf16.mxu0 %v396
    %414 = vmatpush1.bf16.msra.mxu0 %v395
    %415 = vmatprep.subr.bf16.mxu0 0
    %416 = vmatpush1.bf16.msra.mxu0 0
    %417 = vmatprep.subr.bf16.mxu0 0
    %418 = vmatpush1.bf16.msra.mxu0 0
    %419 = vmatprep.subr.bf16.mxu0 0
    %420 = vmatpush1.bf16.msra.mxu0 0
    %421 = vmatprep.subr.bf16.mxu0 0
    %422 = vmatpush1.bf16.msra.mxu0 0
    %423 = vmatprep.subr.bf16.mxu0 0
    %424 = vmatpush1.bf16.msra.mxu0 0
    %425 = vmatprep.subr.bf16.mxu0 0
    %426 = vmatpush1.bf16.msra.mxu0 0
    %427 = vmatprep.subr.bf16.mxu0 0
    %428 = vmatpush1.bf16.msra.mxu0 0
    %429 = vmatprep.subr.bf16.mxu0 0
    %430 = vmatpush1.bf16.msra.mxu0 0
    %431 = vmatprep.subr.bf16.mxu0 0
    %432 = vmatpush1.bf16.msra.mxu0 0
    %433 = vmatprep.subr.bf16.mxu0 0
    %434 = vmatpush1.bf16.msra.mxu0 0
    %435 = vmatprep.subr.bf16.mxu0 0
    %436 = vmatpush1.bf16.msra.mxu0 0
    %437 = vmatprep.subr.bf16.mxu0 0
    %438 = vmatpush1.bf16.msra.mxu0 0
    %439 = vmatprep.subr.bf16.mxu0 0
    %440 = vmatpush1.bf16.msra.mxu0 0
    %441 = vmatprep.subr.bf16.mxu0 0
    %442 = vmatpush1.bf16.msra.mxu0 0
    %443 = vmatprep.subr.bf16.mxu0 0
    %444 = vmatpush1.bf16.msra.mxu0 0
    %445 = vmatprep.mubr.bf16.mxu0 0
    %446 = vmatmul.mubr.bf16.gmra.mrb[0].mxu0 %v402
    %v447 = vpop.f32.mrb[0].mxu0
    %v448 = vadd.f32 %v262, %v447
    %v449 = vpop.f32.mrb[0].mxu0
    %v450 = vadd.f32 %v264, %v449
    %v451 = vpop.f32.mrb[0].mxu0
    %v452 = vadd.f32 %v266, %v451
    %v453 = vpop.f32.mrb[0].mxu0
    %v454 = vadd.f32 %v268, %v453
    %455 = vmatprep.mubr.bf16.mxu0 0
    %456 = vmatmul.mubr.bf16.gmra.mrb[0].mxu0 %v405
    %v457 = vpop.f32.mrb[0].mxu0
    %v458 = vadd.f32 %v272, %v457
    %v459 = vpop.f32.mrb[0].mxu0
    %v460 = vadd.f32 %v274, %v459
    %v461 = vpop.f32.mrb[0].mxu0
    %v462 = vadd.f32 %v276, %v461
    %v463 = vpop.f32.mrb[0].mxu0
    %v464 = vadd.f32 %v278, %v463
    %465 = vmatprep.mubr.bf16.mxu0 0
    %466 = vmatmul.mubr.bf16.gmra.mrb[0].mxu0 %v408
    %v467 = vpop.f32.mrb[0].mxu0
    %v468 = vadd.f32 %v282, %v467
    %v469 = vpop.f32.mrb[0].mxu0
    %v470 = vadd.f32 %v284, %v469
    %v471 = vpop.f32.mrb[0].mxu0
    %v472 = vadd.f32 %v286, %v471
    %v473 = vpop.f32.mrb[0].mxu0
    %v474 = vadd.f32 %v288, %v473
    %475 = vmatprep.mubr.bf16.mxu0 0
    %476 = vmatmul.mubr.bf16.gmra.mrb[0].mxu0 %v411
    %v477 = vpop.f32.mrb[0].mxu0
    %v478 = vadd.f32 %v292, %v477
    %v479 = vpop.f32.mrb[0].mxu0
    %v480 = vadd.f32 %v294, %v479
    %v481 = vpop.f32.mrb[0].mxu0
    %v482 = vadd.f32 %v296, %v481
    %v483 = vpop.f32.mrb[0].mxu0
    %v484 = vadd.f32 %v298, %v483
    %485 = vdwg.mxu0
    %486 = vmatprep.subr.bf16.mxu0 0
    %487 = vmatpush1.bf16.msra.mxu0 %v397
    %488 = vmatprep.subr.bf16.mxu0 0
    %489 = vmatpush1.bf16.msra.mxu0 0
    %490 = vmatprep.subr.bf16.mxu0 0
    %491 = vmatpush1.bf16.msra.mxu0 0
    %492 = vmatprep.subr.bf16.mxu0 0
    %493 = vmatpush1.bf16.msra.mxu0 0
    %494 = vmatprep.subr.bf16.mxu0 0
    %495 = vmatpush1.bf16.msra.mxu0 0
    %496 = vmatprep.subr.bf16.mxu0 0
    %497 = vmatpush1.bf16.msra.mxu0 0
    %498 = vmatprep.subr.bf16.mxu0 0
    %499 = vmatpush1.bf16.msra.mxu0 0
    %500 = vmatprep.subr.bf16.mxu0 0
    %501 = vmatpush1.bf16.msra.mxu0 0
    %502 = vmatprep.subr.bf16.mxu0 0
    %503 = vmatpush1.bf16.msra.mxu0 0
    %504 = vmatprep.subr.bf16.mxu0 0
    %505 = vmatpush1.bf16.msra.mxu0 0
    %506 = vmatprep.subr.bf16.mxu0 0
    %507 = vmatpush1.bf16.msra.mxu0 0
    %508 = vmatprep.subr.bf16.mxu0 0
    %509 = vmatpush1.bf16.msra.mxu0 0
    %510 = vmatprep.subr.bf16.mxu0 0
    %511 = vmatpush1.bf16.msra.mxu0 0
    %512 = vmatprep.subr.bf16.mxu0 0
    %513 = vmatpush1.bf16.msra.mxu0 0
    %514 = vmatprep.subr.bf16.mxu0 0
    %515 = vmatpush1.bf16.msra.mxu0 0
    %516 = vmatprep.subr.bf16.mxu0 0
    %517 = vmatpush1.bf16.msra.mxu0 0
    %518 = vmatprep.mubr.bf16.mxu0 0
    %519 = vmatmul.mubr.bf16.gmra.mrb[0].mxu0 %v402
    %v520 = vpop.f32.mrb[0].mxu0
    %v521 = vadd.f32 %v335, %v520
    %v522 = vpop.f32.mrb[0].mxu0
    %v523 = vpop.f32.mrb[0].mxu0
    %v524 = vadd.f32 %v338, %v523
    %v525 = vpop.f32.mrb[0].mxu0
    %526 = vmatprep.mubr.bf16.mxu0 0
    %527 = vmatmul.mubr.bf16.gmra.mrb[0].mxu0 %v405
    %v528 = vpop.f32.mrb[0].mxu0
    %v529 = vadd.f32 %v343, %v528
    %v530 = vpop.f32.mrb[0].mxu0
    %v531 = vpop.f32.mrb[0].mxu0
    %v532 = vadd.f32 %v346, %v531
    %v533 = vpop.f32.mrb[0].mxu0
    %534 = vmatprep.mubr.bf16.mxu0 0
    %535 = vmatmul.mubr.bf16.gmra.mrb[0].mxu0 %v408
    %v536 = vpop.f32.mrb[0].mxu0
    %v537 = vadd.f32 %v351, %v536
    %v538 = vpop.f32.mrb[0].mxu0
    %v539 = vpop.f32.mrb[0].mxu0
    %v540 = vadd.f32 %v354, %v539
    %v541 = vpop.f32.mrb[0].mxu0
    %542 = vmatprep.mubr.bf16.mxu0 0
    %543 = vmatmul.mubr.bf16.gmra.mrb[0].mxu0 %v411
    %v544 = vpop.f32.mrb[0].mxu0
    %v545 = vadd.f32 %v359, %v544
    %v546 = vpop.f32.mrb[0].mxu0
    %v547 = vpop.f32.mrb[0].mxu0
    %v548 = vadd.f32 %v362, %v547
    %v549 = vpop.f32.mrb[0].mxu0
    %550 = vdwg.mxu0
    %v551 = vld [vmem:[%s0] sm:$0xe]
    %v552 = vld [vmem:[%s0 + $0xc] sm:$0xe]
    %v553 = vld [vmem:[%s0 + $0x18] sm:$0xe]
    %v554 = vld [vmem:[%s0 + $0x24] sm:$0xe]
    %v555 = vld [vmem:[%s0 + $0x30] sm:$0xe]
    %v556 = vld [vmem:[%s0 + $0x3c] sm:$0xe]
    %v557 = vld [vmem:[%s0 + $0x48] sm:$0xe]
    %v558 = vld [vmem:[%s0 + $0x54] sm:$0xe]
    %vm575 = vcmask 1042432
    %vm576 = vcmask 1046532
    %vm577 = vmor %vm575, %vm576
    %v578 = vrot.slane %v551, 5
    %v579 = vrot.slane %v578, 4
    %v580 = vrot.slane %v63, 5
    %v581 = vsel %vm577, %v579, %v580
    %v582 = vrot.slane %v552, 5
    %v583 = vrot.slane %v582, 4
    %v584 = vrot.slane %v64, 5
    %v585 = vsel %vm577, %v583, %v584
    %v586 = vrot.slane %v553, 5
    %v587 = vrot.slane %v586, 4
    %v588 = vrot.slane %v65, 5
    %v589 = vsel %vm577, %v587, %v588
    %v590 = vrot.slane %v554, 5
    %v591 = vrot.slane %v590, 4
    %v592 = vrot.slane %v66, 5
    %v593 = vsel %vm577, %v591, %v592
    %v594 = vrot.slane %v555, 5
    %v595 = vrot.slane %v594, 4
    %v596 = vrot.slane %v67, 5
    %v597 = vsel %vm577, %v595, %v596
    %v598 = vrot.slane %v556, 5
    %v599 = vrot.slane %v598, 4
    %v600 = vrot.slane %v68, 5
    %v601 = vsel %vm577, %v599, %v600
    %v602 = vrot.slane %v557, 5
    %v603 = vrot.slane %v602, 4
    %v604 = vrot.slane %v69, 5
    %v605 = vsel %vm577, %v603, %v604
    %v606 = vrot.slane %v558, 5
    %v607 = vrot.slane %v606, 4
    %v608 = vrot.slane %v70, 5
    %v609 = vsel %vm577, %v607, %v608
    %v610 = vunpack.c.l.b16 %v581
    %v611 = vunpack.c.l.b16 %v585
    %v612 = vunpack.c.l.b16 %v589
    %v613 = vunpack.c.l.b16 %v593
    %v614 = vunpack.c.l.b16 %v597
    %v615 = vunpack.c.l.b16 %v601
    %v616 = vunpack.c.l.b16 %v605
    %v617 = vunpack.c.l.b16 %v609
    %v618 = vpack.c.b16 %v611, %v610
    %v619 = vpack.c.b16 %v613, %v612
    %v620 = vpack.c.b16 %v615, %v614
    %v621 = vpack.c.b16 %v617, %v616
    %v626 = vunpack.c.l.b16 %v47
    %v627 = vunpack.c.h.b16 %v47
    %v628 = vunpack.c.l.b16 %v48
    %v629 = vunpack.c.l.b16 %v49
    %v630 = vunpack.c.h.b16 %v49
    %v631 = vunpack.c.l.b16 %v50
    %v632 = vpack.c.b16 %v629, %v626
    %v633 = vpack.c.b16 %v630, %v627
    %v634 = vpack.c.b16 %v631, %v628
    %v639 = vsel %vm214, %v618, 0
    %v642 = vsel %vm214, %v619, 0
    %v645 = vsel %vm214, %v620, 0
    %v648 = vsel %vm214, %v621, 0
    %650 = vmatprep.subr.bf16.mxu0 %v633
    %651 = vmatpush1.bf16.msra.mxu0 %v632
    %652 = vmatprep.subr.bf16.mxu0 0
    %653 = vmatpush1.bf16.msra.mxu0 0
    %654 = vmatprep.subr.bf16.mxu0 0
    %655 = vmatpush1.bf16.msra.mxu0 0
    %656 = vmatprep.subr.bf16.mxu0 0
    %657 = vmatpush1.bf16.msra.mxu0 0
    %658 = vmatprep.subr.bf16.mxu0 0
    %659 = vmatpush1.bf16.msra.mxu0 0
    %660 = vmatprep.subr.bf16.mxu0 0
    %661 = vmatpush1.bf16.msra.mxu0 0
    %662 = vmatprep.subr.bf16.mxu0 0
    %663 = vmatpush1.bf16.msra.mxu0 0
    %664 = vmatprep.subr.bf16.mxu0 0
    %665 = vmatpush1.bf16.msra.mxu0 0
    %666 = vmatprep.subr.bf16.mxu0 0
    %667 = vmatpush1.bf16.msra.mxu0 0
    %668 = vmatprep.subr.bf16.mxu0 0
    %669 = vmatpush1.bf16.msra.mxu0 0
    %670 = vmatprep.subr.bf16.mxu0 0
    %671 = vmatpush1.bf16.msra.mxu0 0
    %672 = vmatprep.subr.bf16.mxu0 0
    %673 = vmatpush1.bf16.msra.mxu0 0
    %674 = vmatprep.subr.bf16.mxu0 0
    %675 = vmatpush1.bf16.msra.mxu0 0
    %676 = vmatprep.subr.bf16.mxu0 0
    %677 = vmatpush1.bf16.msra.mxu0 0
    %678 = vmatprep.subr.bf16.mxu0 0
    %679 = vmatpush1.bf16.msra.mxu0 0
    %680 = vmatprep.subr.bf16.mxu0 0
    %681 = vmatpush1.bf16.msra.mxu0 0
    %682 = vmatprep.mubr.bf16.mxu0 0
    %683 = vmatmul.mubr.bf16.gmra.mrb[0].mxu0 %v639
    %v684 = vpop.f32.mrb[0].mxu0
    %v685 = vadd.f32 0.0, %v684
    %v686 = vpop.f32.mrb[0].mxu0
    %v687 = vadd.f32 0.0, %v686
    %v688 = vpop.f32.mrb[0].mxu0
    %v689 = vadd.f32 0.0, %v688
    %v690 = vpop.f32.mrb[0].mxu0
    %v691 = vadd.f32 0.0, %v690
    %692 = vmatprep.mubr.bf16.mxu0 0
    %693 = vmatmul.mubr.bf16.gmra.mrb[0].mxu0 %v642
    %v694 = vpop.f32.mrb[0].mxu0
    %v695 = vadd.f32 0.0, %v694
    %v696 = vpop.f32.mrb[0].mxu0
    %v697 = vadd.f32 0.0, %v696
    %v698 = vpop.f32.mrb[0].mxu0
    %v699 = vadd.f32 0.0, %v698
    %v700 = vpop.f32.mrb[0].mxu0
    %v701 = vadd.f32 0.0, %v700
    %702 = vmatprep.mubr.bf16.mxu0 0
    %703 = vmatmul.mubr.bf16.gmra.mrb[0].mxu0 %v645
    %v704 = vpop.f32.mrb[0].mxu0
    %v705 = vadd.f32 0.0, %v704
    %v706 = vpop.f32.mrb[0].mxu0
    %v707 = vadd.f32 0.0, %v706
    %v708 = vpop.f32.mrb[0].mxu0
    %v709 = vadd.f32 0.0, %v708
    %v710 = vpop.f32.mrb[0].mxu0
    %v711 = vadd.f32 0.0, %v710
    %712 = vmatprep.mubr.bf16.mxu0 0
    %713 = vmatmul.mubr.bf16.gmra.mrb[0].mxu0 %v648
    %v714 = vpop.f32.mrb[0].mxu0
    %v715 = vadd.f32 0.0, %v714
    %v716 = vpop.f32.mrb[0].mxu0
    %v717 = vadd.f32 0.0, %v716
    %v718 = vpop.f32.mrb[0].mxu0
    %v719 = vadd.f32 0.0, %v718
    %v720 = vpop.f32.mrb[0].mxu0
    %v721 = vadd.f32 0.0, %v720
    %722 = vdwg.mxu0
    %723 = vmatprep.subr.bf16.mxu0 0
    %724 = vmatpush1.bf16.msra.mxu0 %v634
    %725 = vmatprep.subr.bf16.mxu0 0
    %726 = vmatpush1.bf16.msra.mxu0 0
    %727 = vmatprep.subr.bf16.mxu0 0
    %728 = vmatpush1.bf16.msra.mxu0 0
    %729 = vmatprep.subr.bf16.mxu0 0
    %730 = vmatpush1.bf16.msra.mxu0 0
    %731 = vmatprep.subr.bf16.mxu0 0
    %732 = vmatpush1.bf16.msra.mxu0 0
    %733 = vmatprep.subr.bf16.mxu0 0
    %734 = vmatpush1.bf16.msra.mxu0 0
    %735 = vmatprep.subr.bf16.mxu0 0
    %736 = vmatpush1.bf16.msra.mxu0 0
    %737 = vmatprep.subr.bf16.mxu0 0
    %738 = vmatpush1.bf16.msra.mxu0 0
    %739 = vmatprep.subr.bf16.mxu0 0
    %740 = vmatpush1.bf16.msra.mxu0 0
    %741 = vmatprep.subr.bf16.mxu0 0
    %742 = vmatpush1.bf16.msra.mxu0 0
    %743 = vmatprep.subr.bf16.mxu0 0
    %744 = vmatpush1.bf16.msra.mxu0 0
    %745 = vmatprep.subr.bf16.mxu0 0
    %746 = vmatpush1.bf16.msra.mxu0 0
    %747 = vmatprep.subr.bf16.mxu0 0
    %748 = vmatpush1.bf16.msra.mxu0 0
    %749 = vmatprep.subr.bf16.mxu0 0
    %750 = vmatpush1.bf16.msra.mxu0 0
    %751 = vmatprep.subr.bf16.mxu0 0
    %752 = vmatpush1.bf16.msra.mxu0 0
    %753 = vmatprep.subr.bf16.mxu0 0
    %754 = vmatpush1.bf16.msra.mxu0 0
    %755 = vmatprep.mubr.bf16.mxu0 0
    %756 = vmatmul.mubr.bf16.gmra.mrb[0].mxu0 %v639
    %v757 = vpop.f32.mrb[0].mxu0
    %v758 = vadd.f32 0.0, %v757
    %v759 = vpop.f32.mrb[0].mxu0
    %v760 = vpop.f32.mrb[0].mxu0
    %v761 = vadd.f32 0.0, %v760
    %v762 = vpop.f32.mrb[0].mxu0
    %763 = vmatprep.mubr.bf16.mxu0 0
    %764 = vmatmul.mubr.bf16.gmra.mrb[0].mxu0 %v642
    %v765 = vpop.f32.mrb[0].mxu0
    %v766 = vadd.f32 0.0, %v765
    %v767 = vpop.f32.mrb[0].mxu0
    %v768 = vpop.f32.mrb[0].mxu0
    %v769 = vadd.f32 0.0, %v768
    %v770 = vpop.f32.mrb[0].mxu0
    %771 = vmatprep.mubr.bf16.mxu0 0
    %772 = vmatmul.mubr.bf16.gmra.mrb[0].mxu0 %v645
    %v773 = vpop.f32.mrb[0].mxu0
    %v774 = vadd.f32 0.0, %v773
    %v775 = vpop.f32.mrb[0].mxu0
    %v776 = vpop.f32.mrb[0].mxu0
    %v777 = vadd.f32 0.0, %v776
    %v778 = vpop.f32.mrb[0].mxu0
    %779 = vmatprep.mubr.bf16.mxu0 0
    %780 = vmatmul.mubr.bf16.gmra.mrb[0].mxu0 %v648
    %v781 = vpop.f32.mrb[0].mxu0
    %v782 = vadd.f32 0.0, %v781
    %v783 = vpop.f32.mrb[0].mxu0
    %v784 = vpop.f32.mrb[0].mxu0
    %v785 = vadd.f32 0.0, %v784
    %v786 = vpop.f32.mrb[0].mxu0
    %787 = vdwg.mxu0
    %v788 = vadd.f32 %v448, %v685
    %v789 = vadd.f32 %v450, %v687
    %v790 = vadd.f32 %v521, %v758
    %v791 = vadd.f32 %v452, %v689
    %v792 = vadd.f32 %v454, %v691
    %v793 = vadd.f32 %v524, %v761
    %v794 = vadd.f32 %v458, %v695
    %v795 = vadd.f32 %v460, %v697
    %v796 = vadd.f32 %v529, %v766
    %v797 = vadd.f32 %v462, %v699
    %v798 = vadd.f32 %v464, %v701
    %v799 = vadd.f32 %v532, %v769
    %v800 = vadd.f32 %v468, %v705
    %v801 = vadd.f32 %v470, %v707
    %v802 = vadd.f32 %v537, %v774
    %v803 = vadd.f32 %v472, %v709
    %v804 = vadd.f32 %v474, %v711
    %v805 = vadd.f32 %v540, %v777
    %v806 = vadd.f32 %v478, %v715
    %v807 = vadd.f32 %v480, %v717
    %v808 = vadd.f32 %v545, %v782
    %v809 = vadd.f32 %v482, %v719
    %v810 = vadd.f32 %v484, %v721
    %v811 = vadd.f32 %v548, %v785
    %v812 = vld [vmem:[%s0 + $0x4] sm:$0x3]
    %v813 = vld [vmem:[%s0 + $0x10] sm:$0x3]
    %v814 = vld [vmem:[%s0 + $0x1c] sm:$0x3]
    %v815 = vld [vmem:[%s0 + $0x28] sm:$0x3]
    %v816 = vld [vmem:[%s0 + $0x34] sm:$0x3]
    %v817 = vld [vmem:[%s0 + $0x40] sm:$0x3]
    %v818 = vld [vmem:[%s0 + $0x4c] sm:$0x3]
    %v819 = vld [vmem:[%s0 + $0x58] sm:$0x3]
    %vm820 = vsmask.f32 2304
    %vm821 = vsmask.f32 6416
    %vm822 = vmor %vm820, %vm821
    %v824 = vshrl.u32 %v551, 16
    %v826 = vrot.slane %v824, 5
    %v827 = vshll.u32 %v551, 16
    %v829 = vrot.slane %v827, 6
    %v830 = vor.u32 %v826, %v829
    %v831 = vrot.slane %v830, 4
    %v833 = vshrl.u32 %v812, 16
    %v835 = vrot.slane %v833, 5
    %v836 = vshll.u32 %v812, 16
    %v838 = vrot.slane %v836, 6
    %v839 = vor.u32 %v835, %v838
    %v840 = vsel %vm822, %v831, %v839
    %v842 = vshrl.u32 %v552, 16
    %v844 = vrot.slane %v842, 5
    %v845 = vshll.u32 %v552, 16
    %v847 = vrot.slane %v845, 6
    %v848 = vor.u32 %v844, %v847
    %v849 = vrot.slane %v848, 4
    %v851 = vshrl.u32 %v813, 16
    %v853 = vrot.slane %v851, 5
    %v854 = vshll.u32 %v813, 16
    %v856 = vrot.slane %v854, 6
    %v857 = vor.u32 %v853, %v856
    %v858 = vsel %vm822, %v849, %v857
    %v860 = vshrl.u32 %v553, 16
    %v862 = vrot.slane %v860, 5
    %v863 = vshll.u32 %v553, 16
    %v865 = vrot.slane %v863, 6
    %v866 = vor.u32 %v862, %v865
    %v867 = vrot.slane %v866, 4
    %v869 = vshrl.u32 %v814, 16
    %v871 = vrot.slane %v869, 5
    %v872 = vshll.u32 %v814, 16
    %v874 = vrot.slane %v872, 6
    %v875 = vor.u32 %v871, %v874
    %v876 = vsel %vm822, %v867, %v875
    %v878 = vshrl.u32 %v554, 16
    %v880 = vrot.slane %v878, 5
    %v881 = vshll.u32 %v554, 16
    %v883 = vrot.slane %v881, 6
    %v884 = vor.u32 %v880, %v883
    %v885 = vrot.slane %v884, 4
    %v887 = vshrl.u32 %v815, 16
    %v889 = vrot.slane %v887, 5
    %v890 = vshll.u32 %v815, 16
    %v892 = vrot.slane %v890, 6
    %v893 = vor.u32 %v889, %v892
    %v894 = vsel %vm822, %v885, %v893
    %v896 = vshrl.u32 %v555, 16
    %v898 = vrot.slane %v896, 5
    %v899 = vshll.u32 %v555, 16
    %v901 = vrot.slane %v899, 6
    %v902 = vor.u32 %v898, %v901
    %v903 = vrot.slane %v902, 4
    %v905 = vshrl.u32 %v816, 16
    %v907 = vrot.slane %v905, 5
    %v908 = vshll.u32 %v816, 16
    %v910 = vrot.slane %v908, 6
    %v911 = vor.u32 %v907, %v910
    %v912 = vsel %vm822, %v903, %v911
    %v914 = vshrl.u32 %v556, 16
    %v916 = vrot.slane %v914, 5
    %v917 = vshll.u32 %v556, 16
    %v919 = vrot.slane %v917, 6
    %v920 = vor.u32 %v916, %v919
    %v921 = vrot.slane %v920, 4
    %v923 = vshrl.u32 %v817, 16
    %v925 = vrot.slane %v923, 5
    %v926 = vshll.u32 %v817, 16
    %v928 = vrot.slane %v926, 6
    %v929 = vor.u32 %v925, %v928
    %v930 = vsel %vm822, %v921, %v929
    %v932 = vshrl.u32 %v557, 16
    %v934 = vrot.slane %v932, 5
    %v935 = vshll.u32 %v557, 16
    %v937 = vrot.slane %v935, 6
    %v938 = vor.u32 %v934, %v937
    %v939 = vrot.slane %v938, 4
    %v941 = vshrl.u32 %v818, 16
    %v943 = vrot.slane %v941, 5
    %v944 = vshll.u32 %v818, 16
    %v946 = vrot.slane %v944, 6
    %v947 = vor.u32 %v943, %v946
    %v948 = vsel %vm822, %v939, %v947
    %v950 = vshrl.u32 %v558, 16
    %v952 = vrot.slane %v950, 5
    %v953 = vshll.u32 %v558, 16
    %v955 = vrot.slane %v953, 6
    %v956 = vor.u32 %v952, %v955
    %v957 = vrot.slane %v956, 4
    %v959 = vshrl.u32 %v819, 16
    %v961 = vrot.slane %v959, 5
    %v962 = vshll.u32 %v819, 16
    %v964 = vrot.slane %v962, 6
    %v965 = vor.u32 %v961, %v964
    %v966 = vsel %vm822, %v957, %v965
    %v967 = vunpack.c.l.b16 %v840
    %v968 = vunpack.c.l.b16 %v858
    %v969 = vunpack.c.l.b16 %v876
    %v970 = vunpack.c.l.b16 %v894
    %v971 = vunpack.c.l.b16 %v912
    %v972 = vunpack.c.l.b16 %v930
    %v973 = vunpack.c.l.b16 %v948
    %v974 = vunpack.c.l.b16 %v966
    %v975 = vpack.c.b16 %v968, %v967
    %v976 = vpack.c.b16 %v970, %v969
    %v977 = vpack.c.b16 %v972, %v971
    %v978 = vpack.c.b16 %v974, %v973
    %v983 = vunpack.c.l.b16 %v51
    %v984 = vunpack.c.h.b16 %v51
    %v985 = vunpack.c.l.b16 %v52
    %v986 = vunpack.c.l.b16 %v53
    %v987 = vunpack.c.h.b16 %v53
    %v988 = vunpack.c.l.b16 %v54
    %v989 = vpack.c.b16 %v986, %v983
    %v990 = vpack.c.b16 %v987, %v984
    %v991 = vpack.c.b16 %v988, %v985
    %v996 = vsel %vm214, %v975, 0
    %v999 = vsel %vm214, %v976, 0
    %v1002 = vsel %vm214, %v977, 0
    %v1005 = vsel %vm214, %v978, 0
    %1007 = vmatprep.subr.bf16.mxu0 %v990
    %1008 = vmatpush1.bf16.msra.mxu0 %v989
    %1009 = vmatprep.subr.bf16.mxu0 0
    %1010 = vmatpush1.bf16.msra.mxu0 0
    %1011 = vmatprep.subr.bf16.mxu0 0
    %1012 = vmatpush1.bf16.msra.mxu0 0
    %1013 = vmatprep.subr.bf16.mxu0 0
    %1014 = vmatpush1.bf16.msra.mxu0 0
    %1015 = vmatprep.subr.bf16.mxu0 0
    %1016 = vmatpush1.bf16.msra.mxu0 0
    %1017 = vmatprep.subr.bf16.mxu0 0
    %1018 = vmatpush1.bf16.msra.mxu0 0
    %1019 = vmatprep.subr.bf16.mxu0 0
    %1020 = vmatpush1.bf16.msra.mxu0 0
    %1021 = vmatprep.subr.bf16.mxu0 0
    %1022 = vmatpush1.bf16.msra.mxu0 0
    %1023 = vmatprep.subr.bf16.mxu0 0
    %1024 = vmatpush1.bf16.msra.mxu0 0
    %1025 = vmatprep.subr.bf16.mxu0 0
    %1026 = vmatpush1.bf16.msra.mxu0 0
    %1027 = vmatprep.subr.bf16.mxu0 0
    %1028 = vmatpush1.bf16.msra.mxu0 0
    %1029 = vmatprep.subr.bf16.mxu0 0
    %1030 = vmatpush1.bf16.msra.mxu0 0
    %1031 = vmatprep.subr.bf16.mxu0 0
    %1032 = vmatpush1.bf16.msra.mxu0 0
    %1033 = vmatprep.subr.bf16.mxu0 0
    %1034 = vmatpush1.bf16.msra.mxu0 0
    %1035 = vmatprep.subr.bf16.mxu0 0
    %1036 = vmatpush1.bf16.msra.mxu0 0
    %1037 = vmatprep.subr.bf16.mxu0 0
    %1038 = vmatpush1.bf16.msra.mxu0 0
    %1039 = vmatprep.mubr.bf16.mxu0 0
    %1040 = vmatmul.mubr.bf16.gmra.mrb[0].mxu0 %v996
    %v1041 = vpop.f32.mrb[0].mxu0
    %v1042 = vadd.f32 0.0, %v1041
    %v1043 = vpop.f32.mrb[0].mxu0
    %v1044 = vadd.f32 0.0, %v1043
    %v1045 = vpop.f32.mrb[0].mxu0
    %v1046 = vadd.f32 0.0, %v1045
    %v1047 = vpop.f32.mrb[0].mxu0
    %v1048 = vadd.f32 0.0, %v1047
    %1049 = vmatprep.mubr.bf16.mxu0 0
    %1050 = vmatmul.mubr.bf16.gmra.mrb[0].mxu0 %v999
    %v1051 = vpop.f32.mrb[0].mxu0
    %v1052 = vadd.f32 0.0, %v1051
    %v1053 = vpop.f32.mrb[0].mxu0
    %v1054 = vadd.f32 0.0, %v1053
    %v1055 = vpop.f32.mrb[0].mxu0
    %v1056 = vadd.f32 0.0, %v1055
    %v1057 = vpop.f32.mrb[0].mxu0
    %v1058 = vadd.f32 0.0, %v1057
    %1059 = vmatprep.mubr.bf16.mxu0 0
    %1060 = vmatmul.mubr.bf16.gmra.mrb[0].mxu0 %v1002
    %v1061 = vpop.f32.mrb[0].mxu0
    %v1062 = vadd.f32 0.0, %v1061
    %v1063 = vpop.f32.mrb[0].mxu0
    %v1064 = vadd.f32 0.0, %v1063
    %v1065 = vpop.f32.mrb[0].mxu0
    %v1066 = vadd.f32 0.0, %v1065
    %v1067 = vpop.f32.mrb[0].mxu0
    %v1068 = vadd.f32 0.0, %v1067
    %1069 = vmatprep.mubr.bf16.mxu0 0
    %1070 = vmatmul.mubr.bf16.gmra.mrb[0].mxu0 %v1005
    %v1071 = vpop.f32.mrb[0].mxu0
    %v1072 = vadd.f32 0.0, %v1071
    %v1073 = vpop.f32.mrb[0].mxu0
    %v1074 = vadd.f32 0.0, %v1073
    %v1075 = vpop.f32.mrb[0].mxu0
    %v1076 = vadd.f32 0.0, %v1075
    %v1077 = vpop.f32.mrb[0].mxu0
    %v1078 = vadd.f32 0.0, %v1077
    %1079 = vdwg.mxu0
    %1080 = vmatprep.subr.bf16.mxu0 0
    %1081 = vmatpush1.bf16.msra.mxu0 %v991
    %1082 = vmatprep.subr.bf16.mxu0 0
    %1083 = vmatpush1.bf16.msra.mxu0 0
    %1084 = vmatprep.subr.bf16.mxu0 0
    %1085 = vmatpush1.bf16.msra.mxu0 0
    %1086 = vmatprep.subr.bf16.mxu0 0
    %1087 = vmatpush1.bf16.msra.mxu0 0
    %1088 = vmatprep.subr.bf16.mxu0 0
    %1089 = vmatpush1.bf16.msra.mxu0 0
    %1090 = vmatprep.subr.bf16.mxu0 0
    %1091 = vmatpush1.bf16.msra.mxu0 0
    %1092 = vmatprep.subr.bf16.mxu0 0
    %1093 = vmatpush1.bf16.msra.mxu0 0
    %1094 = vmatprep.subr.bf16.mxu0 0
    %1095 = vmatpush1.bf16.msra.mxu0 0
    %1096 = vmatprep.subr.bf16.mxu0 0
    %1097 = vmatpush1.bf16.msra.mxu0 0
    %1098 = vmatprep.subr.bf16.mxu0 0
    %1099 = vmatpush1.bf16.msra.mxu0 0
    %1100 = vmatprep.subr.bf16.mxu0 0
    %1101 = vmatpush1.bf16.msra.mxu0 0
    %1102 = vmatprep.subr.bf16.mxu0 0
    %1103 = vmatpush1.bf16.msra.mxu0 0
    %1104 = vmatprep.subr.bf16.mxu0 0
    %1105 = vmatpush1.bf16.msra.mxu0 0
    %1106 = vmatprep.subr.bf16.mxu0 0
    %1107 = vmatpush1.bf16.msra.mxu0 0
    %1108 = vmatprep.subr.bf16.mxu0 0
    %1109 = vmatpush1.bf16.msra.mxu0 0
    %1110 = vmatprep.subr.bf16.mxu0 0
    %1111 = vmatpush1.bf16.msra.mxu0 0
    %1112 = vmatprep.mubr.bf16.mxu0 0
    %1113 = vmatmul.mubr.bf16.gmra.mrb[0].mxu0 %v996
    %v1114 = vpop.f32.mrb[0].mxu0
    %v1115 = vadd.f32 0.0, %v1114
    %v1116 = vpop.f32.mrb[0].mxu0
    %v1117 = vpop.f32.mrb[0].mxu0
    %v1118 = vadd.f32 0.0, %v1117
    %v1119 = vpop.f32.mrb[0].mxu0
    %1120 = vmatprep.mubr.bf16.mxu0 0
    %1121 = vmatmul.mubr.bf16.gmra.mrb[0].mxu0 %v999
    %v1122 = vpop.f32.mrb[0].mxu0
    %v1123 = vadd.f32 0.0, %v1122
    %v1124 = vpop.f32.mrb[0].mxu0
    %v1125 = vpop.f32.mrb[0].mxu0
    %v1126 = vadd.f32 0.0, %v1125
    %v1127 = vpop.f32.mrb[0].mxu0
    %1128 = vmatprep.mubr.bf16.mxu0 0
    %1129 = vmatmul.mubr.bf16.gmra.mrb[0].mxu0 %v1002
    %v1130 = vpop.f32.mrb[0].mxu0
    %v1131 = vadd.f32 0.0, %v1130
    %v1132 = vpop.f32.mrb[0].mxu0
    %v1133 = vpop.f32.mrb[0].mxu0
    %v1134 = vadd.f32 0.0, %v1133
    %v1135 = vpop.f32.mrb[0].mxu0
    %1136 = vmatprep.mubr.bf16.mxu0 0
    %1137 = vmatmul.mubr.bf16.gmra.mrb[0].mxu0 %v1005
    %v1138 = vpop.f32.mrb[0].mxu0
    %v1139 = vadd.f32 0.0, %v1138
    %v1140 = vpop.f32.mrb[0].mxu0
    %v1141 = vpop.f32.mrb[0].mxu0
    %v1142 = vadd.f32 0.0, %v1141
    %v1143 = vpop.f32.mrb[0].mxu0
    %1144 = vdwg.mxu0
    %v1145 = vadd.f32 %v788, %v1042
    %v1146 = vadd.f32 %v789, %v1044
    %v1147 = vadd.f32 %v790, %v1115
    %v1148 = vadd.f32 %v791, %v1046
    %v1149 = vadd.f32 %v792, %v1048
    %v1150 = vadd.f32 %v793, %v1118
    %v1151 = vadd.f32 %v794, %v1052
    %v1152 = vadd.f32 %v795, %v1054
    %v1153 = vadd.f32 %v796, %v1123
    %v1154 = vadd.f32 %v797, %v1056
    %v1155 = vadd.f32 %v798, %v1058
    %v1156 = vadd.f32 %v799, %v1126
    %v1157 = vadd.f32 %v800, %v1062
    %v1158 = vadd.f32 %v801, %v1064
    %v1159 = vadd.f32 %v802, %v1131
    %v1160 = vadd.f32 %v803, %v1066
    %v1161 = vadd.f32 %v804, %v1068
    %v1162 = vadd.f32 %v805, %v1134
    %v1163 = vadd.f32 %v806, %v1072
    %v1164 = vadd.f32 %v807, %v1074
    %v1165 = vadd.f32 %v808, %v1139
    %v1166 = vadd.f32 %v809, %v1076
    %v1167 = vadd.f32 %v810, %v1078
    %v1168 = vadd.f32 %v811, %v1142
    %v1169 = vrot.slane %v1145, 4
    %v1170 = vmax.f32 %v1145, %v1169
    %v1171 = vrot.slane %v1170, 2
    %v1172 = vmax.f32 %v1170, %v1171
    %v1173 = vrot.slane %v1172, 1
    %v1174 = vmax.f32 %v1172, %v1173
    %v1175 = vrot.slane %v1146, 4
    %v1176 = vmax.f32 %v1146, %v1175
    %v1177 = vrot.slane %v1176, 2
    %v1178 = vmax.f32 %v1176, %v1177
    %v1179 = vrot.slane %v1178, 1
    %v1180 = vmax.f32 %v1178, %v1179
    %v1181 = vrot.slane %v1147, 4
    %v1182 = vmax.f32 %v1147, %v1181
    %v1183 = vrot.slane %v1182, 2
    %v1184 = vmax.f32 %v1182, %v1183
    %v1185 = vrot.slane %v1184, 1
    %v1186 = vmax.f32 %v1184, %v1185
    %v1187 = vrot.slane %v1148, 4
    %v1188 = vmax.f32 %v1148, %v1187
    %v1189 = vrot.slane %v1188, 2
    %v1190 = vmax.f32 %v1188, %v1189
    %v1191 = vrot.slane %v1190, 1
    %v1192 = vmax.f32 %v1190, %v1191
    %v1193 = vrot.slane %v1149, 4
    %v1194 = vmax.f32 %v1149, %v1193
    %v1195 = vrot.slane %v1194, 2
    %v1196 = vmax.f32 %v1194, %v1195
    %v1197 = vrot.slane %v1196, 1
    %v1198 = vmax.f32 %v1196, %v1197
    %v1199 = vrot.slane %v1150, 4
    %v1200 = vmax.f32 %v1150, %v1199
    %v1201 = vrot.slane %v1200, 2
    %v1202 = vmax.f32 %v1200, %v1201
    %v1203 = vrot.slane %v1202, 1
    %v1204 = vmax.f32 %v1202, %v1203
    %v1205 = vrot.slane %v1151, 4
    %v1206 = vmax.f32 %v1151, %v1205
    %v1207 = vrot.slane %v1206, 2
    %v1208 = vmax.f32 %v1206, %v1207
    %v1209 = vrot.slane %v1208, 1
    %v1210 = vmax.f32 %v1208, %v1209
    %v1211 = vrot.slane %v1152, 4
    %v1212 = vmax.f32 %v1152, %v1211
    %v1213 = vrot.slane %v1212, 2
    %v1214 = vmax.f32 %v1212, %v1213
    %v1215 = vrot.slane %v1214, 1
    %v1216 = vmax.f32 %v1214, %v1215
    %v1217 = vrot.slane %v1153, 4
    %v1218 = vmax.f32 %v1153, %v1217
    %v1219 = vrot.slane %v1218, 2
    %v1220 = vmax.f32 %v1218, %v1219
    %v1221 = vrot.slane %v1220, 1
    %v1222 = vmax.f32 %v1220, %v1221
    %v1223 = vrot.slane %v1154, 4
    %v1224 = vmax.f32 %v1154, %v1223
    %v1225 = vrot.slane %v1224, 2
    %v1226 = vmax.f32 %v1224, %v1225
    %v1227 = vrot.slane %v1226, 1
    %v1228 = vmax.f32 %v1226, %v1227
    %v1229 = vrot.slane %v1155, 4
    %v1230 = vmax.f32 %v1155, %v1229
    %v1231 = vrot.slane %v1230, 2
    %v1232 = vmax.f32 %v1230, %v1231
    %v1233 = vrot.slane %v1232, 1
    %v1234 = vmax.f32 %v1232, %v1233
    %v1235 = vrot.slane %v1156, 4
    %v1236 = vmax.f32 %v1156, %v1235
    %v1237 = vrot.slane %v1236, 2
    %v1238 = vmax.f32 %v1236, %v1237
    %v1239 = vrot.slane %v1238, 1
    %v1240 = vmax.f32 %v1238, %v1239
    %v1241 = vrot.slane %v1157, 4
    %v1242 = vmax.f32 %v1157, %v1241
    %v1243 = vrot.slane %v1242, 2
    %v1244 = vmax.f32 %v1242, %v1243
    %v1245 = vrot.slane %v1244, 1
    %v1246 = vmax.f32 %v1244, %v1245
    %v1247 = vrot.slane %v1158, 4
    %v1248 = vmax.f32 %v1158, %v1247
    %v1249 = vrot.slane %v1248, 2
    %v1250 = vmax.f32 %v1248, %v1249
    %v1251 = vrot.slane %v1250, 1
    %v1252 = vmax.f32 %v1250, %v1251
    %v1253 = vrot.slane %v1159, 4
    %v1254 = vmax.f32 %v1159, %v1253
    %v1255 = vrot.slane %v1254, 2
    %v1256 = vmax.f32 %v1254, %v1255
    %v1257 = vrot.slane %v1256, 1
    %v1258 = vmax.f32 %v1256, %v1257
    %v1259 = vrot.slane %v1160, 4
    %v1260 = vmax.f32 %v1160, %v1259
    %v1261 = vrot.slane %v1260, 2
    %v1262 = vmax.f32 %v1260, %v1261
    %v1263 = vrot.slane %v1262, 1
    %v1264 = vmax.f32 %v1262, %v1263
    %v1265 = vrot.slane %v1161, 4
    %v1266 = vmax.f32 %v1161, %v1265
    %v1267 = vrot.slane %v1266, 2
    %v1268 = vmax.f32 %v1266, %v1267
    %v1269 = vrot.slane %v1268, 1
    %v1270 = vmax.f32 %v1268, %v1269
    %v1271 = vrot.slane %v1162, 4
    %v1272 = vmax.f32 %v1162, %v1271
    %v1273 = vrot.slane %v1272, 2
    %v1274 = vmax.f32 %v1272, %v1273
    %v1275 = vrot.slane %v1274, 1
    %v1276 = vmax.f32 %v1274, %v1275
    %v1277 = vrot.slane %v1163, 4
    %v1278 = vmax.f32 %v1163, %v1277
    %v1279 = vrot.slane %v1278, 2
    %v1280 = vmax.f32 %v1278, %v1279
    %v1281 = vrot.slane %v1280, 1
    %v1282 = vmax.f32 %v1280, %v1281
    %v1283 = vrot.slane %v1164, 4
    %v1284 = vmax.f32 %v1164, %v1283
    %v1285 = vrot.slane %v1284, 2
    %v1286 = vmax.f32 %v1284, %v1285
    %v1287 = vrot.slane %v1286, 1
    %v1288 = vmax.f32 %v1286, %v1287
    %v1289 = vrot.slane %v1165, 4
    %v1290 = vmax.f32 %v1165, %v1289
    %v1291 = vrot.slane %v1290, 2
    %v1292 = vmax.f32 %v1290, %v1291
    %v1293 = vrot.slane %v1292, 1
    %v1294 = vmax.f32 %v1292, %v1293
    %v1295 = vrot.slane %v1166, 4
    %v1296 = vmax.f32 %v1166, %v1295
    %v1297 = vrot.slane %v1296, 2
    %v1298 = vmax.f32 %v1296, %v1297
    %v1299 = vrot.slane %v1298, 1
    %v1300 = vmax.f32 %v1298, %v1299
    %v1301 = vrot.slane %v1167, 4
    %v1302 = vmax.f32 %v1167, %v1301
    %v1303 = vrot.slane %v1302, 2
    %v1304 = vmax.f32 %v1302, %v1303
    %v1305 = vrot.slane %v1304, 1
    %v1306 = vmax.f32 %v1304, %v1305
    %v1307 = vrot.slane %v1168, 4
    %v1308 = vmax.f32 %v1168, %v1307
    %v1309 = vrot.slane %v1308, 2
    %v1310 = vmax.f32 %v1308, %v1309
    %v1311 = vrot.slane %v1310, 1
    %v1312 = vmax.f32 %v1310, %v1311
    %v1313 = vld [vmem:[%s0 + $0x4] sm:$0xf]
    %v1314 = vld [vmem:[%s0 + $0x10] sm:$0xf]
    %v1315 = vld [vmem:[%s0 + $0x1c] sm:$0xf]
    %v1316 = vld [vmem:[%s0 + $0x28] sm:$0xf]
    %v1317 = vld [vmem:[%s0 + $0x34] sm:$0xf]
    %v1318 = vld [vmem:[%s0 + $0x40] sm:$0xf]
    %v1319 = vld [vmem:[%s0 + $0x4c] sm:$0xf]
    %v1320 = vld [vmem:[%s0 + $0x58] sm:$0xf]
    %v1321 = vld [vmem:[%s0 + $0x8] sm:$0x1]
    %v1322 = vld [vmem:[%s0 + $0x14] sm:$0x1]
    %v1323 = vld [vmem:[%s0 + $0x20] sm:$0x1]
    %v1324 = vld [vmem:[%s0 + $0x2c] sm:$0x1]
    %v1325 = vld [vmem:[%s0 + $0x38] sm:$0x1]
    %v1326 = vld [vmem:[%s0 + $0x44] sm:$0x1]
    %v1327 = vld [vmem:[%s0 + $0x50] sm:$0x1]
    %v1328 = vld [vmem:[%s0 + $0x5c] sm:$0x1]
    %v1330 = vshrl.u32 %v1313, 16
    %v1332 = vrot.slane %v1330, 4
    %v1333 = vshll.u32 %v1313, 16
    %v1335 = vrot.slane %v1333, 5
    %v1336 = vor.u32 %v1332, %v1335
    %v1337 = vrot.slane %v1336, 4
    %v1339 = vshll.u32 %v1321, 16
    %v1341 = vrot.slane %v1339, 5
    %v1342 = vsel %vm73, %v1337, %v1341
    %v1344 = vshrl.u32 %v1314, 16
    %v1346 = vrot.slane %v1344, 4
    %v1347 = vshll.u32 %v1314, 16
    %v1349 = vrot.slane %v1347, 5
    %v1350 = vor.u32 %v1346, %v1349
    %v1351 = vrot.slane %v1350, 4
    %v1353 = vshll.u32 %v1322, 16
    %v1355 = vrot.slane %v1353, 5
    %v1356 = vsel %vm73, %v1351, %v1355
    %v1358 = vshrl.u32 %v1315, 16
    %v1360 = vrot.slane %v1358, 4
    %v1361 = vshll.u32 %v1315, 16
    %v1363 = vrot.slane %v1361, 5
    %v1364 = vor.u32 %v1360, %v1363
    %v1365 = vrot.slane %v1364, 4
    %v1367 = vshll.u32 %v1323, 16
    %v1369 = vrot.slane %v1367, 5
    %v1370 = vsel %vm73, %v1365, %v1369
    %v1372 = vshrl.u32 %v1316, 16
    %v1374 = vrot.slane %v1372, 4
    %v1375 = vshll.u32 %v1316, 16
    %v1377 = vrot.slane %v1375, 5
    %v1378 = vor.u32 %v1374, %v1377
    %v1379 = vrot.slane %v1378, 4
    %v1381 = vshll.u32 %v1324, 16
    %v1383 = vrot.slane %v1381, 5
    %v1384 = vsel %vm73, %v1379, %v1383
    %v1386 = vshrl.u32 %v1317, 16
    %v1388 = vrot.slane %v1386, 4
    %v1389 = vshll.u32 %v1317, 16
    %v1391 = vrot.slane %v1389, 5
    %v1392 = vor.u32 %v1388, %v1391
    %v1393 = vrot.slane %v1392, 4
    %v1395 = vshll.u32 %v1325, 16
    %v1397 = vrot.slane %v1395, 5
    %v1398 = vsel %vm73, %v1393, %v1397
    %v1400 = vshrl.u32 %v1318, 16
    %v1402 = vrot.slane %v1400, 4
    %v1403 = vshll.u32 %v1318, 16
    %v1405 = vrot.slane %v1403, 5
    %v1406 = vor.u32 %v1402, %v1405
    %v1407 = vrot.slane %v1406, 4
    %v1409 = vshll.u32 %v1326, 16
    %v1411 = vrot.slane %v1409, 5
    %v1412 = vsel %vm73, %v1407, %v1411
    %v1414 = vshrl.u32 %v1319, 16
    %v1416 = vrot.slane %v1414, 4
    %v1417 = vshll.u32 %v1319, 16
    %v1419 = vrot.slane %v1417, 5
    %v1420 = vor.u32 %v1416, %v1419
    %v1421 = vrot.slane %v1420, 4
    %v1423 = vshll.u32 %v1327, 16
    %v1425 = vrot.slane %v1423, 5
    %v1426 = vsel %vm73, %v1421, %v1425
    %v1428 = vshrl.u32 %v1320, 16
    %v1430 = vrot.slane %v1428, 4
    %v1431 = vshll.u32 %v1320, 16
    %v1433 = vrot.slane %v1431, 5
    %v1434 = vor.u32 %v1430, %v1433
    %v1435 = vrot.slane %v1434, 4
    %v1437 = vshll.u32 %v1328, 16
    %v1439 = vrot.slane %v1437, 5
    %v1440 = vsel %vm73, %v1435, %v1439
    %v1441 = vunpack.c.l.b16 %v1342
    %v1442 = vunpack.c.l.b16 %v1356
    %v1443 = vunpack.c.l.b16 %v1370
    %v1444 = vunpack.c.l.b16 %v1384
    %v1445 = vunpack.c.l.b16 %v1398
    %v1446 = vunpack.c.l.b16 %v1412
    %v1447 = vunpack.c.l.b16 %v1426
    %v1448 = vunpack.c.l.b16 %v1440
    %v1449 = vpack.c.b16 %v1442, %v1441
    %v1450 = vpack.c.b16 %v1444, %v1443
    %v1451 = vpack.c.b16 %v1446, %v1445
    %v1452 = vpack.c.b16 %v1448, %v1447
    %v1454 = vsel %vm214, %v1449, 0
    %v1457 = vsel %vm214, %v1450, 0
    %v1460 = vsel %vm214, %v1451, 0
    %v1463 = vsel %vm214, %v1452, 0
    %1465 = vmatprep.subr.bf16.mxu0 %v209
    %1466 = vmatpush1.bf16.msra.mxu0 %v208
    %1467 = vmatprep.subr.bf16.mxu0 0
    %1468 = vmatpush1.bf16.msra.mxu0 0
    %1469 = vmatprep.subr.bf16.mxu0 0
    %1470 = vmatpush1.bf16.msra.mxu0 0
    %1471 = vmatprep.subr.bf16.mxu0 0
    %1472 = vmatpush1.bf16.msra.mxu0 0
    %1473 = vmatprep.subr.bf16.mxu0 0
    %1474 = vmatpush1.bf16.msra.mxu0 0
    %1475 = vmatprep.subr.bf16.mxu0 0
    %1476 = vmatpush1.bf16.msra.mxu0 0
    %1477 = vmatprep.subr.bf16.mxu0 0
    %1478 = vmatpush1.bf16.msra.mxu0 0
    %1479 = vmatprep.subr.bf16.mxu0 0
    %1480 = vmatpush1.bf16.msra.mxu0 0
    %1481 = vmatprep.subr.bf16.mxu0 0
    %1482 = vmatpush1.bf16.msra.mxu0 0
    %1483 = vmatprep.subr.bf16.mxu0 0
    %1484 = vmatpush1.bf16.msra.mxu0 0
    %1485 = vmatprep.subr.bf16.mxu0 0
    %1486 = vmatpush1.bf16.msra.mxu0 0
    %1487 = vmatprep.subr.bf16.mxu0 0
    %1488 = vmatpush1.bf16.msra.mxu0 0
    %1489 = vmatprep.subr.bf16.mxu0 0
    %1490 = vmatpush1.bf16.msra.mxu0 0
    %1491 = vmatprep.subr.bf16.mxu0 0
    %1492 = vmatpush1.bf16.msra.mxu0 0
    %1493 = vmatprep.subr.bf16.mxu0 0
    %1494 = vmatpush1.bf16.msra.mxu0 0
    %1495 = vmatprep.subr.bf16.mxu0 0
    %1496 = vmatpush1.bf16.msra.mxu0 0
    %1497 = vmatprep.mubr.bf16.mxu0 0
    %1498 = vmatmul.mubr.bf16.gmra.mrb[0].mxu0 %v1454
    %v1499 = vpop.f32.mrb[0].mxu0
    %v1500 = vadd.f32 0.0, %v1499
    %v1501 = vpop.f32.mrb[0].mxu0
    %v1502 = vadd.f32 0.0, %v1501
    %v1503 = vpop.f32.mrb[0].mxu0
    %v1504 = vadd.f32 0.0, %v1503
    %v1505 = vpop.f32.mrb[0].mxu0
    %v1506 = vadd.f32 0.0, %v1505
    %1507 = vmatprep.mubr.bf16.mxu0 0
    %1508 = vmatmul.mubr.bf16.gmra.mrb[0].mxu0 %v1457
    %v1509 = vpop.f32.mrb[0].mxu0
    %v1510 = vadd.f32 0.0, %v1509
    %v1511 = vpop.f32.mrb[0].mxu0
    %v1512 = vadd.f32 0.0, %v1511
    %v1513 = vpop.f32.mrb[0].mxu0
    %v1514 = vadd.f32 0.0, %v1513
    %v1515 = vpop.f32.mrb[0].mxu0
    %v1516 = vadd.f32 0.0, %v1515
    %1517 = vmatprep.mubr.bf16.mxu0 0
    %1518 = vmatmul.mubr.bf16.gmra.mrb[0].mxu0 %v1460
    %v1519 = vpop.f32.mrb[0].mxu0
    %v1520 = vadd.f32 0.0, %v1519
    %v1521 = vpop.f32.mrb[0].mxu0
    %v1522 = vadd.f32 0.0, %v1521
    %v1523 = vpop.f32.mrb[0].mxu0
    %v1524 = vadd.f32 0.0, %v1523
    %v1525 = vpop.f32.mrb[0].mxu0
    %v1526 = vadd.f32 0.0, %v1525
    %1527 = vmatprep.mubr.bf16.mxu0 0
    %1528 = vmatmul.mubr.bf16.gmra.mrb[0].mxu0 %v1463
    %v1529 = vpop.f32.mrb[0].mxu0
    %v1530 = vadd.f32 0.0, %v1529
    %v1531 = vpop.f32.mrb[0].mxu0
    %v1532 = vadd.f32 0.0, %v1531
    %v1533 = vpop.f32.mrb[0].mxu0
    %v1534 = vadd.f32 0.0, %v1533
    %v1535 = vpop.f32.mrb[0].mxu0
    %v1536 = vadd.f32 0.0, %v1535
    %1537 = vdwg.mxu0
    %1538 = vmatprep.subr.bf16.mxu0 0
    %1539 = vmatpush1.bf16.msra.mxu0 %v210
    %1540 = vmatprep.subr.bf16.mxu0 0
    %1541 = vmatpush1.bf16.msra.mxu0 0
    %1542 = vmatprep.subr.bf16.mxu0 0
    %1543 = vmatpush1.bf16.msra.mxu0 0
    %1544 = vmatprep.subr.bf16.mxu0 0
    %1545 = vmatpush1.bf16.msra.mxu0 0
    %1546 = vmatprep.subr.bf16.mxu0 0
    %1547 = vmatpush1.bf16.msra.mxu0 0
    %1548 = vmatprep.subr.bf16.mxu0 0
    %1549 = vmatpush1.bf16.msra.mxu0 0
    %1550 = vmatprep.subr.bf16.mxu0 0
    %1551 = vmatpush1.bf16.msra.mxu0 0
    %1552 = vmatprep.subr.bf16.mxu0 0
    %1553 = vmatpush1.bf16.msra.mxu0 0
    %1554 = vmatprep.subr.bf16.mxu0 0
    %1555 = vmatpush1.bf16.msra.mxu0 0
    %1556 = vmatprep.subr.bf16.mxu0 0
    %1557 = vmatpush1.bf16.msra.mxu0 0
    %1558 = vmatprep.subr.bf16.mxu0 0
    %1559 = vmatpush1.bf16.msra.mxu0 0
    %1560 = vmatprep.subr.bf16.mxu0 0
    %1561 = vmatpush1.bf16.msra.mxu0 0
    %1562 = vmatprep.subr.bf16.mxu0 0
    %1563 = vmatpush1.bf16.msra.mxu0 0
    %1564 = vmatprep.subr.bf16.mxu0 0
    %1565 = vmatpush1.bf16.msra.mxu0 0
    %1566 = vmatprep.subr.bf16.mxu0 0
    %1567 = vmatpush1.bf16.msra.mxu0 0
    %1568 = vmatprep.subr.bf16.mxu0 0
    %1569 = vmatpush1.bf16.msra.mxu0 0
    %1570 = vmatprep.mubr.bf16.mxu0 0
    %1571 = vmatmul.mubr.bf16.gmra.mrb[0].mxu0 %v1454
    %v1572 = vpop.f32.mrb[0].mxu0
    %v1573 = vadd.f32 0.0, %v1572
    %v1574 = vpop.f32.mrb[0].mxu0
    %v1575 = vpop.f32.mrb[0].mxu0
    %v1576 = vadd.f32 0.0, %v1575
    %v1577 = vpop.f32.mrb[0].mxu0
    %1578 = vmatprep.mubr.bf16.mxu0 0
    %1579 = vmatmul.mubr.bf16.gmra.mrb[0].mxu0 %v1457
    %v1580 = vpop.f32.mrb[0].mxu0
    %v1581 = vadd.f32 0.0, %v1580
    %v1582 = vpop.f32.mrb[0].mxu0
    %v1583 = vpop.f32.mrb[0].mxu0
    %v1584 = vadd.f32 0.0, %v1583
    %v1585 = vpop.f32.mrb[0].mxu0
    %1586 = vmatprep.mubr.bf16.mxu0 0
    %1587 = vmatmul.mubr.bf16.gmra.mrb[0].mxu0 %v1460
    %v1588 = vpop.f32.mrb[0].mxu0
    %v1589 = vadd.f32 0.0, %v1588
    %v1590 = vpop.f32.mrb[0].mxu0
    %v1591 = vpop.f32.mrb[0].mxu0
    %v1592 = vadd.f32 0.0, %v1591
    %v1593 = vpop.f32.mrb[0].mxu0
    %1594 = vmatprep.mubr.bf16.mxu0 0
    %1595 = vmatmul.mubr.bf16.gmra.mrb[0].mxu0 %v1463
    %v1596 = vpop.f32.mrb[0].mxu0
    %v1597 = vadd.f32 0.0, %v1596
    %v1598 = vpop.f32.mrb[0].mxu0
    %v1599 = vpop.f32.mrb[0].mxu0
    %v1600 = vadd.f32 0.0, %v1599
    %v1601 = vpop.f32.mrb[0].mxu0
    %1602 = vdwg.mxu0
    %v1611 = vunpack.c.l.b16 %v1313
    %v1612 = vunpack.c.l.b16 %v1314
    %v1613 = vunpack.c.l.b16 %v1315
    %v1614 = vunpack.c.l.b16 %v1316
    %v1615 = vunpack.c.l.b16 %v1317
    %v1616 = vunpack.c.l.b16 %v1318
    %v1617 = vunpack.c.l.b16 %v1319
    %v1618 = vunpack.c.l.b16 %v1320
    %v1619 = vpack.c.b16 %v1612, %v1611
    %v1620 = vpack.c.b16 %v1614, %v1613
    %v1621 = vpack.c.b16 %v1616, %v1615
    %v1622 = vpack.c.b16 %v1618, %v1617
    %v1624 = vsel %vm214, %v1619, 0
    %v1627 = vsel %vm214, %v1620, 0
    %v1630 = vsel %vm214, %v1621, 0
    %v1633 = vsel %vm214, %v1622, 0
    %1635 = vmatprep.subr.bf16.mxu0 %v396
    %1636 = vmatpush1.bf16.msra.mxu0 %v395
    %1637 = vmatprep.subr.bf16.mxu0 0
    %1638 = vmatpush1.bf16.msra.mxu0 0
    %1639 = vmatprep.subr.bf16.mxu0 0
    %1640 = vmatpush1.bf16.msra.mxu0 0
    %1641 = vmatprep.subr.bf16.mxu0 0
    %1642 = vmatpush1.bf16.msra.mxu0 0
    %1643 = vmatprep.subr.bf16.mxu0 0
    %1644 = vmatpush1.bf16.msra.mxu0 0
    %1645 = vmatprep.subr.bf16.mxu0 0
    %1646 = vmatpush1.bf16.msra.mxu0 0
    %1647 = vmatprep.subr.bf16.mxu0 0
    %1648 = vmatpush1.bf16.msra.mxu0 0
    %1649 = vmatprep.subr.bf16.mxu0 0
    %1650 = vmatpush1.bf16.msra.mxu0 0
    %1651 = vmatprep.subr.bf16.mxu0 0
    %1652 = vmatpush1.bf16.msra.mxu0 0
    %1653 = vmatprep.subr.bf16.mxu0 0
    %1654 = vmatpush1.bf16.msra.mxu0 0
    %1655 = vmatprep.subr.bf16.mxu0 0
    %1656 = vmatpush1.bf16.msra.mxu0 0
    %1657 = vmatprep.subr.bf16.mxu0 0
    %1658 = vmatpush1.bf16.msra.mxu0 0
    %1659 = vmatprep.subr.bf16.mxu0 0
    %1660 = vmatpush1.bf16.msra.mxu0 0
    %1661 = vmatprep.subr.bf16.mxu0 0
    %1662 = vmatpush1.bf16.msra.mxu0 0
    %1663 = vmatprep.subr.bf16.mxu0 0
    %1664 = vmatpush1.bf16.msra.mxu0 0
    %1665 = vmatprep.subr.bf16.mxu0 0
    %1666 = vmatpush1.bf16.msra.mxu0 0
    %1667 = vmatprep.mubr.bf16.mxu0 0
    %1668 = vmatmul.mubr.bf16.gmra.mrb[0].mxu0 %v1624
    %v1669 = vpop.f32.mrb[0].mxu0
    %v1670 = vadd.f32 %v1500, %v1669
    %v1671 = vpop.f32.mrb[0].mxu0
    %v1672 = vadd.f32 %v1502, %v1671
    %v1673 = vpop.f32.mrb[0].mxu0
    %v1674 = vadd.f32 %v1504, %v1673
    %v1675 = vpop.f32.mrb[0].mxu0
    %v1676 = vadd.f32 %v1506, %v1675
    %1677 = vmatprep.mubr.bf16.mxu0 0
    %1678 = vmatmul.mubr.bf16.gmra.mrb[0].mxu0 %v1627
    %v1679 = vpop.f32.mrb[0].mxu0
    %v1680 = vadd.f32 %v1510, %v1679
    %v1681 = vpop.f32.mrb[0].mxu0
    %v1682 = vadd.f32 %v1512, %v1681
    %v1683 = vpop.f32.mrb[0].mxu0
    %v1684 = vadd.f32 %v1514, %v1683
    %v1685 = vpop.f32.mrb[0].mxu0
    %v1686 = vadd.f32 %v1516, %v1685
    %1687 = vmatprep.mubr.bf16.mxu0 0
    %1688 = vmatmul.mubr.bf16.gmra.mrb[0].mxu0 %v1630
    %v1689 = vpop.f32.mrb[0].mxu0
    %v1690 = vadd.f32 %v1520, %v1689
    %v1691 = vpop.f32.mrb[0].mxu0
    %v1692 = vadd.f32 %v1522, %v1691
    %v1693 = vpop.f32.mrb[0].mxu0
    %v1694 = vadd.f32 %v1524, %v1693
    %v1695 = vpop.f32.mrb[0].mxu0
    %v1696 = vadd.f32 %v1526, %v1695
    %1697 = vmatprep.mubr.bf16.mxu0 0
    %1698 = vmatmul.mubr.bf16.gmra.mrb[0].mxu0 %v1633
    %v1699 = vpop.f32.mrb[0].mxu0
    %v1700 = vadd.f32 %v1530, %v1699
    %v1701 = vpop.f32.mrb[0].mxu0
    %v1702 = vadd.f32 %v1532, %v1701
    %v1703 = vpop.f32.mrb[0].mxu0
    %v1704 = vadd.f32 %v1534, %v1703
    %v1705 = vpop.f32.mrb[0].mxu0
    %v1706 = vadd.f32 %v1536, %v1705
    %1707 = vdwg.mxu0
    %1708 = vmatprep.subr.bf16.mxu0 0
    %1709 = vmatpush1.bf16.msra.mxu0 %v397
    %1710 = vmatprep.subr.bf16.mxu0 0
    %1711 = vmatpush1.bf16.msra.mxu0 0
    %1712 = vmatprep.subr.bf16.mxu0 0
    %1713 = vmatpush1.bf16.msra.mxu0 0
    %1714 = vmatprep.subr.bf16.mxu0 0
    %1715 = vmatpush1.bf16.msra.mxu0 0
    %1716 = vmatprep.subr.bf16.mxu0 0
    %1717 = vmatpush1.bf16.msra.mxu0 0
    %1718 = vmatprep.subr.bf16.mxu0 0
    %1719 = vmatpush1.bf16.msra.mxu0 0
    %1720 = vmatprep.subr.bf16.mxu0 0
    %1721 = vmatpush1.bf16.msra.mxu0 0
    %1722 = vmatprep.subr.bf16.mxu0 0
    %1723 = vmatpush1.bf16.msra.mxu0 0
    %1724 = vmatprep.subr.bf16.mxu0 0
    %1725 = vmatpush1.bf16.msra.mxu0 0
    %1726 = vmatprep.subr.bf16.mxu0 0
    %1727 = vmatpush1.bf16.msra.mxu0 0
    %1728 = vmatprep.subr.bf16.mxu0 0
    %1729 = vmatpush1.bf16.msra.mxu0 0
    %1730 = vmatprep.subr.bf16.mxu0 0
    %1731 = vmatpush1.bf16.msra.mxu0 0
    %1732 = vmatprep.subr.bf16.mxu0 0
    %1733 = vmatpush1.bf16.msra.mxu0 0
    %1734 = vmatprep.subr.bf16.mxu0 0
    %1735 = vmatpush1.bf16.msra.mxu0 0
    %1736 = vmatprep.subr.bf16.mxu0 0
    %1737 = vmatpush1.bf16.msra.mxu0 0
    %1738 = vmatprep.subr.bf16.mxu0 0
    %1739 = vmatpush1.bf16.msra.mxu0 0
    %1740 = vmatprep.mubr.bf16.mxu0 0
    %1741 = vmatmul.mubr.bf16.gmra.mrb[0].mxu0 %v1624
    %v1742 = vpop.f32.mrb[0].mxu0
    %v1743 = vadd.f32 %v1573, %v1742
    %v1744 = vpop.f32.mrb[0].mxu0
    %v1745 = vpop.f32.mrb[0].mxu0
    %v1746 = vadd.f32 %v1576, %v1745
    %v1747 = vpop.f32.mrb[0].mxu0
    %1748 = vmatprep.mubr.bf16.mxu0 0
    %1749 = vmatmul.mubr.bf16.gmra.mrb[0].mxu0 %v1627
    %v1750 = vpop.f32.mrb[0].mxu0
    %v1751 = vadd.f32 %v1581, %v1750
    %v1752 = vpop.f32.mrb[0].mxu0
    %v1753 = vpop.f32.mrb[0].mxu0
    %v1754 = vadd.f32 %v1584, %v1753
    %v1755 = vpop.f32.mrb[0].mxu0
    %1756 = vmatprep.mubr.bf16.mxu0 0
    %1757 = vmatmul.mubr.bf16.gmra.mrb[0].mxu0 %v1630
    %v1758 = vpop.f32.mrb[0].mxu0
    %v1759 = vadd.f32 %v1589, %v1758
    %v1760 = vpop.f32.mrb[0].mxu0
    %v1761 = vpop.f32.mrb[0].mxu0
    %v1762 = vadd.f32 %v1592, %v1761
    %v1763 = vpop.f32.mrb[0].mxu0
    %1764 = vmatprep.mubr.bf16.mxu0 0
    %1765 = vmatmul.mubr.bf16.gmra.mrb[0].mxu0 %v1633
    %v1766 = vpop.f32.mrb[0].mxu0
    %v1767 = vadd.f32 %v1597, %v1766
    %v1768 = vpop.f32.mrb[0].mxu0
    %v1769 = vpop.f32.mrb[0].mxu0
    %v1770 = vadd.f32 %v1600, %v1769
    %v1771 = vpop.f32.mrb[0].mxu0
    %1772 = vdwg.mxu0
    %v1773 = vld [vmem:[%s0 + $0x4] sm:$0xe]
    %v1774 = vld [vmem:[%s0 + $0x10] sm:$0xe]
    %v1775 = vld [vmem:[%s0 + $0x1c] sm:$0xe]
    %v1776 = vld [vmem:[%s0 + $0x28] sm:$0xe]
    %v1777 = vld [vmem:[%s0 + $0x34] sm:$0xe]
    %v1778 = vld [vmem:[%s0 + $0x40] sm:$0xe]
    %v1779 = vld [vmem:[%s0 + $0x4c] sm:$0xe]
    %v1780 = vld [vmem:[%s0 + $0x58] sm:$0xe]
    %v1797 = vrot.slane %v1773, 5
    %v1798 = vrot.slane %v1797, 4
    %v1799 = vrot.slane %v1321, 5
    %v1800 = vsel %vm577, %v1798, %v1799
    %v1801 = vrot.slane %v1774, 5
    %v1802 = vrot.slane %v1801, 4
    %v1803 = vrot.slane %v1322, 5
    %v1804 = vsel %vm577, %v1802, %v1803
    %v1805 = vrot.slane %v1775, 5
    %v1806 = vrot.slane %v1805, 4
    %v1807 = vrot.slane %v1323, 5
    %v1808 = vsel %vm577, %v1806, %v1807
    %v1809 = vrot.slane %v1776, 5
    %v1810 = vrot.slane %v1809, 4
    %v1811 = vrot.slane %v1324, 5
    %v1812 = vsel %vm577, %v1810, %v1811
    %v1813 = vrot.slane %v1777, 5
    %v1814 = vrot.slane %v1813, 4
    %v1815 = vrot.slane %v1325, 5
    %v1816 = vsel %vm577, %v1814, %v1815
    %v1817 = vrot.slane %v1778, 5
    %v1818 = vrot.slane %v1817, 4
    %v1819 = vrot.slane %v1326, 5
    %v1820 = vsel %vm577, %v1818, %v1819
    %v1821 = vrot.slane %v1779, 5
    %v1822 = vrot.slane %v1821, 4
    %v1823 = vrot.slane %v1327, 5
    %v1824 = vsel %vm577, %v1822, %v1823
    %v1825 = vrot.slane %v1780, 5
    %v1826 = vrot.slane %v1825, 4
    %v1827 = vrot.slane %v1328, 5
    %v1828 = vsel %vm577, %v1826, %v1827
    %v1829 = vunpack.c.l.b16 %v1800
    %v1830 = vunpack.c.l.b16 %v1804
    %v1831 = vunpack.c.l.b16 %v1808
    %v1832 = vunpack.c.l.b16 %v1812
    %v1833 = vunpack.c.l.b16 %v1816
    %v1834 = vunpack.c.l.b16 %v1820
    %v1835 = vunpack.c.l.b16 %v1824
    %v1836 = vunpack.c.l.b16 %v1828
    %v1837 = vpack.c.b16 %v1830, %v1829
    %v1838 = vpack.c.b16 %v1832, %v1831
    %v1839 = vpack.c.b16 %v1834, %v1833
    %v1840 = vpack.c.b16 %v1836, %v1835
    %v1842 = vsel %vm214, %v1837, 0
    %v1845 = vsel %vm214, %v1838, 0
    %v1848 = vsel %vm214, %v1839, 0
    %v1851 = vsel %vm214, %v1840, 0
    %1853 = vmatprep.subr.bf16.mxu0 %v633
    %1854 = vmatpush1.bf16.msra.mxu0 %v632
    %1855 = vmatprep.subr.bf16.mxu0 0
    %1856 = vmatpush1.bf16.msra.mxu0 0
    %1857 = vmatprep.subr.bf16.mxu0 0
    %1858 = vmatpush1.bf16.msra.mxu0 0
    %1859 = vmatprep.subr.bf16.mxu0 0
    %1860 = vmatpush1.bf16.msra.mxu0 0
    %1861 = vmatprep.subr.bf16.mxu0 0
    %1862 = vmatpush1.bf16.msra.mxu0 0
    %1863 = vmatprep.subr.bf16.mxu0 0
    %1864 = vmatpush1.bf16.msra.mxu0 0
    %1865 = vmatprep.subr.bf16.mxu0 0
    %1866 = vmatpush1.bf16.msra.mxu0 0
    %1867 = vmatprep.subr.bf16.mxu0 0
    %1868 = vmatpush1.bf16.msra.mxu0 0
    %1869 = vmatprep.subr.bf16.mxu0 0
    %1870 = vmatpush1.bf16.msra.mxu0 0
    %1871 = vmatprep.subr.bf16.mxu0 0
    %1872 = vmatpush1.bf16.msra.mxu0 0
    %1873 = vmatprep.subr.bf16.mxu0 0
    %1874 = vmatpush1.bf16.msra.mxu0 0
    %1875 = vmatprep.subr.bf16.mxu0 0
    %1876 = vmatpush1.bf16.msra.mxu0 0
    %1877 = vmatprep.subr.bf16.mxu0 0
    %1878 = vmatpush1.bf16.msra.mxu0 0
    %1879 = vmatprep.subr.bf16.mxu0 0
    %1880 = vmatpush1.bf16.msra.mxu0 0
    %1881 = vmatprep.subr.bf16.mxu0 0
    %1882 = vmatpush1.bf16.msra.mxu0 0
    %1883 = vmatprep.subr.bf16.mxu0 0
    %1884 = vmatpush1.bf16.msra.mxu0 0
    %1885 = vmatprep.mubr.bf16.mxu0 0
    %1886 = vmatmul.mubr.bf16.gmra.mrb[0].mxu0 %v1842
    %v1887 = vpop.f32.mrb[0].mxu0
    %v1888 = vadd.f32 0.0, %v1887
    %v1889 = vpop.f32.mrb[0].mxu0
    %v1890 = vadd.f32 0.0, %v1889
    %v1891 = vpop.f32.mrb[0].mxu0
    %v1892 = vadd.f32 0.0, %v1891
    %v1893 = vpop.f32.mrb[0].mxu0
    %v1894 = vadd.f32 0.0, %v1893
    %1895 = vmatprep.mubr.bf16.mxu0 0
    %1896 = vmatmul.mubr.bf16.gmra.mrb[0].mxu0 %v1845
    %v1897 = vpop.f32.mrb[0].mxu0
    %v1898 = vadd.f32 0.0, %v1897
    %v1899 = vpop.f32.mrb[0].mxu0
    %v1900 = vadd.f32 0.0, %v1899
    %v1901 = vpop.f32.mrb[0].mxu0
    %v1902 = vadd.f32 0.0, %v1901
    %v1903 = vpop.f32.mrb[0].mxu0
    %v1904 = vadd.f32 0.0, %v1903
    %1905 = vmatprep.mubr.bf16.mxu0 0
    %1906 = vmatmul.mubr.bf16.gmra.mrb[0].mxu0 %v1848
    %v1907 = vpop.f32.mrb[0].mxu0
    %v1908 = vadd.f32 0.0, %v1907
    %v1909 = vpop.f32.mrb[0].mxu0
    %v1910 = vadd.f32 0.0, %v1909
    %v1911 = vpop.f32.mrb[0].mxu0
    %v1912 = vadd.f32 0.0, %v1911
    %v1913 = vpop.f32.mrb[0].mxu0
    %v1914 = vadd.f32 0.0, %v1913
    %1915 = vmatprep.mubr.bf16.mxu0 0
    %1916 = vmatmul.mubr.bf16.gmra.mrb[0].mxu0 %v1851
    %v1917 = vpop.f32.mrb[0].mxu0
    %v1918 = vadd.f32 0.0, %v1917
    %v1919 = vpop.f32.mrb[0].mxu0
    %v1920 = vadd.f32 0.0, %v1919
    %v1921 = vpop.f32.mrb[0].mxu0
    %v1922 = vadd.f32 0.0, %v1921
    %v1923 = vpop.f32.mrb[0].mxu0
    %v1924 = vadd.f32 0.0, %v1923
    %1925 = vdwg.mxu0
    %1926 = vmatprep.subr.bf16.mxu0 0
    %1927 = vmatpush1.bf16.msra.mxu0 %v634
    %1928 = vmatprep.subr.bf16.mxu0 0
    %1929 = vmatpush1.bf16.msra.mxu0 0
    %1930 = vmatprep.subr.bf16.mxu0 0
    %1931 = vmatpush1.bf16.msra.mxu0 0
    %1932 = vmatprep.subr.bf16.mxu0 0
    %1933 = vmatpush1.bf16.msra.mxu0 0
    %1934 = vmatprep.subr.bf16.mxu0 0
    %1935 = vmatpush1.bf16.msra.mxu0 0
    %1936 = vmatprep.subr.bf16.mxu0 0
    %1937 = vmatpush1.bf16.msra.mxu0 0
    %1938 = vmatprep.subr.bf16.mxu0 0
    %1939 = vmatpush1.bf16.msra.mxu0 0
    %1940 = vmatprep.subr.bf16.mxu0 0
    %1941 = vmatpush1.bf16.msra.mxu0 0
    %1942 = vmatprep.subr.bf16.mxu0 0
    %1943 = vmatpush1.bf16.msra.mxu0 0
    %1944 = vmatprep.subr.bf16.mxu0 0
    %1945 = vmatpush1.bf16.msra.mxu0 0
    %1946 = vmatprep.subr.bf16.mxu0 0
    %1947 = vmatpush1.bf16.msra.mxu0 0
    %1948 = vmatprep.subr.bf16.mxu0 0
    %1949 = vmatpush1.bf16.msra.mxu0 0
    %1950 = vmatprep.subr.bf16.mxu0 0
    %1951 = vmatpush1.bf16.msra.mxu0 0
    %1952 = vmatprep.subr.bf16.mxu0 0
    %1953 = vmatpush1.bf16.msra.mxu0 0
    %1954 = vmatprep.subr.bf16.mxu0 0
    %1955 = vmatpush1.bf16.msra.mxu0 0
    %1956 = vmatprep.subr.bf16.mxu0 0
    %1957 = vmatpush1.bf16.msra.mxu0 0
    %1958 = vmatprep.mubr.bf16.mxu0 0
    %1959 = vmatmul.mubr.bf16.gmra.mrb[0].mxu0 %v1842
    %v1960 = vpop.f32.mrb[0].mxu0
    %v1961 = vadd.f32 0.0, %v1960
    %v1962 = vpop.f32.mrb[0].mxu0
    %v1963 = vpop.f32.mrb[0].mxu0
    %v1964 = vadd.f32 0.0, %v1963
    %v1965 = vpop.f32.mrb[0].mxu0
    %1966 = vmatprep.mubr.bf16.mxu0 0
    %1967 = vmatmul.mubr.bf16.gmra.mrb[0].mxu0 %v1845
    %v1968 = vpop.f32.mrb[0].mxu0
    %v1969 = vadd.f32 0.0, %v1968
    %v1970 = vpop.f32.mrb[0].mxu0
    %v1971 = vpop.f32.mrb[0].mxu0
    %v1972 = vadd.f32 0.0, %v1971
    %v1973 = vpop.f32.mrb[0].mxu0
    %1974 = vmatprep.mubr.bf16.mxu0 0
    %1975 = vmatmul.mubr.bf16.gmra.mrb[0].mxu0 %v1848
    %v1976 = vpop.f32.mrb[0].mxu0
    %v1977 = vadd.f32 0.0, %v1976
    %v1978 = vpop.f32.mrb[0].mxu0
    %v1979 = vpop.f32.mrb[0].mxu0
    %v1980 = vadd.f32 0.0, %v1979
    %v1981 = vpop.f32.mrb[0].mxu0
    %1982 = vmatprep.mubr.bf16.mxu0 0
    %1983 = vmatmul.mubr.bf16.gmra.mrb[0].mxu0 %v1851
    %v1984 = vpop.f32.mrb[0].mxu0
    %v1985 = vadd.f32 0.0, %v1984
    %v1986 = vpop.f32.mrb[0].mxu0
    %v1987 = vpop.f32.mrb[0].mxu0
    %v1988 = vadd.f32 0.0, %v1987
    %v1989 = vpop.f32.mrb[0].mxu0
    %1990 = vdwg.mxu0
    %v1991 = vadd.f32 %v1670, %v1888
    %v1992 = vadd.f32 %v1672, %v1890
    %v1993 = vadd.f32 %v1743, %v1961
    %v1994 = vadd.f32 %v1674, %v1892
    %v1995 = vadd.f32 %v1676, %v1894
    %v1996 = vadd.f32 %v1746, %v1964
    %v1997 = vadd.f32 %v1680, %v1898
    %v1998 = vadd.f32 %v1682, %v1900
    %v1999 = vadd.f32 %v1751, %v1969
    %v2000 = vadd.f32 %v1684, %v1902
    %v2001 = vadd.f32 %v1686, %v1904
    %v2002 = vadd.f32 %v1754, %v1972
    %v2003 = vadd.f32 %v1690, %v1908
    %v2004 = vadd.f32 %v1692, %v1910
    %v2005 = vadd.f32 %v1759, %v1977
    %v2006 = vadd.f32 %v1694, %v1912
    %v2007 = vadd.f32 %v1696, %v1914
    %v2008 = vadd.f32 %v1762, %v1980
    %v2009 = vadd.f32 %v1700, %v1918
    %v2010 = vadd.f32 %v1702, %v1920
    %v2011 = vadd.f32 %v1767, %v1985
    %v2012 = vadd.f32 %v1704, %v1922
    %v2013 = vadd.f32 %v1706, %v1924
    %v2014 = vadd.f32 %v1770, %v1988
    %v2015 = vld [vmem:[%s0 + $0x8] sm:$0x3]
    %v2016 = vld [vmem:[%s0 + $0x14] sm:$0x3]
    %v2017 = vld [vmem:[%s0 + $0x20] sm:$0x3]
    %v2018 = vld [vmem:[%s0 + $0x2c] sm:$0x3]
    %v2019 = vld [vmem:[%s0 + $0x38] sm:$0x3]
    %v2020 = vld [vmem:[%s0 + $0x44] sm:$0x3]
    %v2021 = vld [vmem:[%s0 + $0x50] sm:$0x3]
    %v2022 = vld [vmem:[%s0 + $0x5c] sm:$0x3]
    %v2024 = vshrl.u32 %v1773, 16
    %v2026 = vrot.slane %v2024, 5
    %v2027 = vshll.u32 %v1773, 16
    %v2029 = vrot.slane %v2027, 6
    %v2030 = vor.u32 %v2026, %v2029
    %v2031 = vrot.slane %v2030, 4
    %v2033 = vshrl.u32 %v2015, 16
    %v2035 = vrot.slane %v2033, 5
    %v2036 = vshll.u32 %v2015, 16
    %v2038 = vrot.slane %v2036, 6
    %v2039 = vor.u32 %v2035, %v2038
    %v2040 = vsel %vm822, %v2031, %v2039
    %v2042 = vshrl.u32 %v1774, 16
    %v2044 = vrot.slane %v2042, 5
    %v2045 = vshll.u32 %v1774, 16
    %v2047 = vrot.slane %v2045, 6
    %v2048 = vor.u32 %v2044, %v2047
    %v2049 = vrot.slane %v2048, 4
    %v2051 = vshrl.u32 %v2016, 16
    %v2053 = vrot.slane %v2051, 5
    %v2054 = vshll.u32 %v2016, 16
    %v2056 = vrot.slane %v2054, 6
    %v2057 = vor.u32 %v2053, %v2056
    %v2058 = vsel %vm822, %v2049, %v2057
    %v2060 = vshrl.u32 %v1775, 16
    %v2062 = vrot.slane %v2060, 5
    %v2063 = vshll.u32 %v1775, 16
    %v2065 = vrot.slane %v2063, 6
    %v2066 = vor.u32 %v2062, %v2065
    %v2067 = vrot.slane %v2066, 4
    %v2069 = vshrl.u32 %v2017, 16
    %v2071 = vrot.slane %v2069, 5
    %v2072 = vshll.u32 %v2017, 16
    %v2074 = vrot.slane %v2072, 6
    %v2075 = vor.u32 %v2071, %v2074
    %v2076 = vsel %vm822, %v2067, %v2075
    %v2078 = vshrl.u32 %v1776, 16
    %v2080 = vrot.slane %v2078, 5
    %v2081 = vshll.u32 %v1776, 16
    %v2083 = vrot.slane %v2081, 6
    %v2084 = vor.u32 %v2080, %v2083
    %v2085 = vrot.slane %v2084, 4
    %v2087 = vshrl.u32 %v2018, 16
    %v2089 = vrot.slane %v2087, 5
    %v2090 = vshll.u32 %v2018, 16
    %v2092 = vrot.slane %v2090, 6
    %v2093 = vor.u32 %v2089, %v2092
    %v2094 = vsel %vm822, %v2085, %v2093
    %v2096 = vshrl.u32 %v1777, 16
    %v2098 = vrot.slane %v2096, 5
    %v2099 = vshll.u32 %v1777, 16
    %v2101 = vrot.slane %v2099, 6
    %v2102 = vor.u32 %v2098, %v2101
    %v2103 = vrot.slane %v2102, 4
    %v2105 = vshrl.u32 %v2019, 16
    %v2107 = vrot.slane %v2105, 5
    %v2108 = vshll.u32 %v2019, 16
    %v2110 = vrot.slane %v2108, 6
    %v2111 = vor.u32 %v2107, %v2110
    %v2112 = vsel %vm822, %v2103, %v2111
    %v2114 = vshrl.u32 %v1778, 16
    %v2116 = vrot.slane %v2114, 5
    %v2117 = vshll.u32 %v1778, 16
    %v2119 = vrot.slane %v2117, 6
    %v2120 = vor.u32 %v2116, %v2119
    %v2121 = vrot.slane %v2120, 4
    %v2123 = vshrl.u32 %v2020, 16
    %v2125 = vrot.slane %v2123, 5
    %v2126 = vshll.u32 %v2020, 16
    %v2128 = vrot.slane %v2126, 6
    %v2129 = vor.u32 %v2125, %v2128
    %v2130 = vsel %vm822, %v2121, %v2129
    %v2132 = vshrl.u32 %v1779, 16
    %v2134 = vrot.slane %v2132, 5
    %v2135 = vshll.u32 %v1779, 16
    %v2137 = vrot.slane %v2135, 6
    %v2138 = vor.u32 %v2134, %v2137
    %v2139 = vrot.slane %v2138, 4
    %v2141 = vshrl.u32 %v2021, 16
    %v2143 = vrot.slane %v2141, 5
    %v2144 = vshll.u32 %v2021, 16
    %v2146 = vrot.slane %v2144, 6
    %v2147 = vor.u32 %v2143, %v2146
    %v2148 = vsel %vm822, %v2139, %v2147
    %v2150 = vshrl.u32 %v1780, 16
    %v2152 = vrot.slane %v2150, 5
    %v2153 = vshll.u32 %v1780, 16
    %v2155 = vrot.slane %v2153, 6
    %v2156 = vor.u32 %v2152, %v2155
    %v2157 = vrot.slane %v2156, 4
    %v2159 = vshrl.u32 %v2022, 16
    %v2161 = vrot.slane %v2159, 5
    %v2162 = vshll.u32 %v2022, 16
    %v2164 = vrot.slane %v2162, 6
    %v2165 = vor.u32 %v2161, %v2164
    %v2166 = vsel %vm822, %v2157, %v2165
    %v2167 = vunpack.c.l.b16 %v2040
    %v2168 = vunpack.c.l.b16 %v2058
    %v2169 = vunpack.c.l.b16 %v2076
    %v2170 = vunpack.c.l.b16 %v2094
    %v2171 = vunpack.c.l.b16 %v2112
    %v2172 = vunpack.c.l.b16 %v2130
    %v2173 = vunpack.c.l.b16 %v2148
    %v2174 = vunpack.c.l.b16 %v2166
    %v2175 = vpack.c.b16 %v2168, %v2167
    %v2176 = vpack.c.b16 %v2170, %v2169
    %v2177 = vpack.c.b16 %v2172, %v2171
    %v2178 = vpack.c.b16 %v2174, %v2173
    %v2180 = vsel %vm214, %v2175, 0
    %v2183 = vsel %vm214, %v2176, 0
    %v2186 = vsel %vm214, %v2177, 0
    %v2189 = vsel %vm214, %v2178, 0
    %2191 = vmatprep.subr.bf16.mxu0 %v990
    %2192 = vmatpush1.bf16.msra.mxu0 %v989
    %2193 = vmatprep.subr.bf16.mxu0 0
    %2194 = vmatpush1.bf16.msra.mxu0 0
    %2195 = vmatprep.subr.bf16.mxu0 0
    %2196 = vmatpush1.bf16.msra.mxu0 0
    %2197 = vmatprep.subr.bf16.mxu0 0
    %2198 = vmatpush1.bf16.msra.mxu0 0
    %2199 = vmatprep.subr.bf16.mxu0 0
    %2200 = vmatpush1.bf16.msra.mxu0 0
    %2201 = vmatprep.subr.bf16.mxu0 0
    %2202 = vmatpush1.bf16.msra.mxu0 0
    %2203 = vmatprep.subr.bf16.mxu0 0
    %2204 = vmatpush1.bf16.msra.mxu0 0
    %2205 = vmatprep.subr.bf16.mxu0 0
    %2206 = vmatpush1.bf16.msra.mxu0 0
    %2207 = vmatprep.subr.bf16.mxu0 0
    %2208 = vmatpush1.bf16.msra.mxu0 0
    %2209 = vmatprep.subr.bf16.mxu0 0
    %2210 = vmatpush1.bf16.msra.mxu0 0
    %2211 = vmatprep.subr.bf16.mxu0 0
    %2212 = vmatpush1.bf16.msra.mxu0 0
    %2213 = vmatprep.subr.bf16.mxu0 0
    %2214 = vmatpush1.bf16.msra.mxu0 0
    %2215 = vmatprep.subr.bf16.mxu0 0
    %2216 = vmatpush1.bf16.msra.mxu0 0
    %2217 = vmatprep.subr.bf16.mxu0 0
    %2218 = vmatpush1.bf16.msra.mxu0 0
    %2219 = vmatprep.subr.bf16.mxu0 0
    %2220 = vmatpush1.bf16.msra.mxu0 0
    %2221 = vmatprep.subr.bf16.mxu0 0
    %2222 = vmatpush1.bf16.msra.mxu0 0
    %2223 = vmatprep.mubr.bf16.mxu0 0
    %2224 = vmatmul.mubr.bf16.gmra.mrb[0].mxu0 %v2180
    %v2225 = vpop.f32.mrb[0].mxu0
    %v2226 = vadd.f32 0.0, %v2225
    %v2227 = vpop.f32.mrb[0].mxu0
    %v2228 = vadd.f32 0.0, %v2227
    %v2229 = vpop.f32.mrb[0].mxu0
    %v2230 = vadd.f32 0.0, %v2229
    %v2231 = vpop.f32.mrb[0].mxu0
    %v2232 = vadd.f32 0.0, %v2231
    %2233 = vmatprep.mubr.bf16.mxu0 0
    %2234 = vmatmul.mubr.bf16.gmra.mrb[0].mxu0 %v2183
    %v2235 = vpop.f32.mrb[0].mxu0
    %v2236 = vadd.f32 0.0, %v2235
    %v2237 = vpop.f32.mrb[0].mxu0
    %v2238 = vadd.f32 0.0, %v2237
    %v2239 = vpop.f32.mrb[0].mxu0
    %v2240 = vadd.f32 0.0, %v2239
    %v2241 = vpop.f32.mrb[0].mxu0
    %v2242 = vadd.f32 0.0, %v2241
    %2243 = vmatprep.mubr.bf16.mxu0 0
    %2244 = vmatmul.mubr.bf16.gmra.mrb[0].mxu0 %v2186
    %v2245 = vpop.f32.mrb[0].mxu0
    %v2246 = vadd.f32 0.0, %v2245
    %v2247 = vpop.f32.mrb[0].mxu0
    %v2248 = vadd.f32 0.0, %v2247
    %v2249 = vpop.f32.mrb[0].mxu0
    %v2250 = vadd.f32 0.0, %v2249
    %v2251 = vpop.f32.mrb[0].mxu0
    %v2252 = vadd.f32 0.0, %v2251
    %2253 = vmatprep.mubr.bf16.mxu0 0
    %2254 = vmatmul.mubr.bf16.gmra.mrb[0].mxu0 %v2189
    %v2255 = vpop.f32.mrb[0].mxu0
    %v2256 = vadd.f32 0.0, %v2255
    %v2257 = vpop.f32.mrb[0].mxu0
    %v2258 = vadd.f32 0.0, %v2257
    %v2259 = vpop.f32.mrb[0].mxu0
    %v2260 = vadd.f32 0.0, %v2259
    %v2261 = vpop.f32.mrb[0].mxu0
    %v2262 = vadd.f32 0.0, %v2261
    %2263 = vdwg.mxu0
    %2264 = vmatprep.subr.bf16.mxu0 0
    %2265 = vmatpush1.bf16.msra.mxu0 %v991
    %2266 = vmatprep.subr.bf16.mxu0 0
    %2267 = vmatpush1.bf16.msra.mxu0 0
    %2268 = vmatprep.subr.bf16.mxu0 0
    %2269 = vmatpush1.bf16.msra.mxu0 0
    %2270 = vmatprep.subr.bf16.mxu0 0
    %2271 = vmatpush1.bf16.msra.mxu0 0
    %2272 = vmatprep.subr.bf16.mxu0 0
    %2273 = vmatpush1.bf16.msra.mxu0 0
    %2274 = vmatprep.subr.bf16.mxu0 0
    %2275 = vmatpush1.bf16.msra.mxu0 0
    %2276 = vmatprep.subr.bf16.mxu0 0
    %2277 = vmatpush1.bf16.msra.mxu0 0
    %2278 = vmatprep.subr.bf16.mxu0 0
    %2279 = vmatpush1.bf16.msra.mxu0 0
    %2280 = vmatprep.subr.bf16.mxu0 0
    %2281 = vmatpush1.bf16.msra.mxu0 0
    %2282 = vmatprep.subr.bf16.mxu0 0
    %2283 = vmatpush1.bf16.msra.mxu0 0
    %2284 = vmatprep.subr.bf16.mxu0 0
    %2285 = vmatpush1.bf16.msra.mxu0 0
    %2286 = vmatprep.subr.bf16.mxu0 0
    %2287 = vmatpush1.bf16.msra.mxu0 0
    %2288 = vmatprep.subr.bf16.mxu0 0
    %2289 = vmatpush1.bf16.msra.mxu0 0
    %2290 = vmatprep.subr.bf16.mxu0 0
    %2291 = vmatpush1.bf16.msra.mxu0 0
    %2292 = vmatprep.subr.bf16.mxu0 0
    %2293 = vmatpush1.bf16.msra.mxu0 0
    %2294 = vmatprep.subr.bf16.mxu0 0
    %2295 = vmatpush1.bf16.msra.mxu0 0
    %2296 = vmatprep.mubr.bf16.mxu0 0
    %2297 = vmatmul.mubr.bf16.gmra.mrb[0].mxu0 %v2180
    %v2298 = vpop.f32.mrb[0].mxu0
    %v2299 = vadd.f32 0.0, %v2298
    %v2300 = vpop.f32.mrb[0].mxu0
    %v2301 = vpop.f32.mrb[0].mxu0
    %v2302 = vadd.f32 0.0, %v2301
    %v2303 = vpop.f32.mrb[0].mxu0
    %2304 = vmatprep.mubr.bf16.mxu0 0
    %2305 = vmatmul.mubr.bf16.gmra.mrb[0].mxu0 %v2183
    %v2306 = vpop.f32.mrb[0].mxu0
    %v2307 = vadd.f32 0.0, %v2306
    %v2308 = vpop.f32.mrb[0].mxu0
    %v2309 = vpop.f32.mrb[0].mxu0
    %v2310 = vadd.f32 0.0, %v2309
    %v2311 = vpop.f32.mrb[0].mxu0
    %2312 = vmatprep.mubr.bf16.mxu0 0
    %2313 = vmatmul.mubr.bf16.gmra.mrb[0].mxu0 %v2186
    %v2314 = vpop.f32.mrb[0].mxu0
    %v2315 = vadd.f32 0.0, %v2314
    %v2316 = vpop.f32.mrb[0].mxu0
    %v2317 = vpop.f32.mrb[0].mxu0
    %v2318 = vadd.f32 0.0, %v2317
    %v2319 = vpop.f32.mrb[0].mxu0
    %2320 = vmatprep.mubr.bf16.mxu0 0
    %2321 = vmatmul.mubr.bf16.gmra.mrb[0].mxu0 %v2189
    %v2322 = vpop.f32.mrb[0].mxu0
    %v2323 = vadd.f32 0.0, %v2322
    %v2324 = vpop.f32.mrb[0].mxu0
    %v2325 = vpop.f32.mrb[0].mxu0
    %v2326 = vadd.f32 0.0, %v2325
    %v2327 = vpop.f32.mrb[0].mxu0
    %2328 = vdwg.mxu0
    %v2329 = vadd.f32 %v1991, %v2226
    %v2330 = vadd.f32 %v1992, %v2228
    %v2331 = vadd.f32 %v1993, %v2299
    %v2332 = vadd.f32 %v1994, %v2230
    %v2333 = vadd.f32 %v1995, %v2232
    %v2334 = vadd.f32 %v1996, %v2302
    %v2335 = vadd.f32 %v1997, %v2236
    %v2336 = vadd.f32 %v1998, %v2238
    %v2337 = vadd.f32 %v1999, %v2307
    %v2338 = vadd.f32 %v2000, %v2240
    %v2339 = vadd.f32 %v2001, %v2242
    %v2340 = vadd.f32 %v2002, %v2310
    %v2341 = vadd.f32 %v2003, %v2246
    %v2342 = vadd.f32 %v2004, %v2248
    %v2343 = vadd.f32 %v2005, %v2315
    %v2344 = vadd.f32 %v2006, %v2250
    %v2345 = vadd.f32 %v2007, %v2252
    %v2346 = vadd.f32 %v2008, %v2318
    %v2347 = vadd.f32 %v2009, %v2256
    %v2348 = vadd.f32 %v2010, %v2258
    %v2349 = vadd.f32 %v2011, %v2323
    %v2350 = vadd.f32 %v2012, %v2260
    %v2351 = vadd.f32 %v2013, %v2262
    %v2352 = vadd.f32 %v2014, %v2326
    %v2353 = vld [vmem:[%s2 + $0x18] sm:$0xff]
    %v2354 = vld [vmem:[%s2 + $0x20] sm:$0xff]
    %v2355 = vld [vmem:[%s2 + $0x28] sm:$0xff]
    %v2356 = vadd.f32 %v2329, %v2353
    %v2357 = vadd.f32 %v2330, %v2354
    %v2358 = vadd.f32 %v2331, %v2355
    %v2359 = vadd.f32 %v2332, %v2353
    %v2360 = vadd.f32 %v2333, %v2354
    %v2361 = vadd.f32 %v2334, %v2355
    %v2362 = vadd.f32 %v2335, %v2353
    %v2363 = vadd.f32 %v2336, %v2354
    %v2364 = vadd.f32 %v2337, %v2355
    %v2365 = vadd.f32 %v2338, %v2353
    %v2366 = vadd.f32 %v2339, %v2354
    %v2367 = vadd.f32 %v2340, %v2355
    %v2368 = vadd.f32 %v2341, %v2353
    %v2369 = vadd.f32 %v2342, %v2354
    %v2370 = vadd.f32 %v2343, %v2355
    %v2371 = vadd.f32 %v2344, %v2353
    %v2372 = vadd.f32 %v2345, %v2354
    %v2373 = vadd.f32 %v2346, %v2355
    %v2374 = vadd.f32 %v2347, %v2353
    %v2375 = vadd.f32 %v2348, %v2354
    %v2376 = vadd.f32 %v2349, %v2355
    %v2377 = vadd.f32 %v2350, %v2353
    %v2378 = vadd.f32 %v2351, %v2354
    %v2379 = vadd.f32 %v2352, %v2355
    %v2380 = vrot.slane %v2356, 4
    %v2381 = vmax.f32 %v2356, %v2380
    %v2382 = vrot.slane %v2381, 2
    %v2383 = vmax.f32 %v2381, %v2382
    %v2384 = vrot.slane %v2383, 1
    %v2385 = vmax.f32 %v2383, %v2384
    %v2386 = vrot.slane %v2357, 4
    %v2387 = vmax.f32 %v2357, %v2386
    %v2388 = vrot.slane %v2387, 2
    %v2389 = vmax.f32 %v2387, %v2388
    %v2390 = vrot.slane %v2389, 1
    %v2391 = vmax.f32 %v2389, %v2390
    %v2392 = vrot.slane %v2358, 4
    %v2393 = vmax.f32 %v2358, %v2392
    %v2394 = vrot.slane %v2393, 2
    %v2395 = vmax.f32 %v2393, %v2394
    %v2396 = vrot.slane %v2395, 1
    %v2397 = vmax.f32 %v2395, %v2396
    %v2398 = vrot.slane %v2359, 4
    %v2399 = vmax.f32 %v2359, %v2398
    %v2400 = vrot.slane %v2399, 2
    %v2401 = vmax.f32 %v2399, %v2400
    %v2402 = vrot.slane %v2401, 1
    %v2403 = vmax.f32 %v2401, %v2402
    %v2404 = vrot.slane %v2360, 4
    %v2405 = vmax.f32 %v2360, %v2404
    %v2406 = vrot.slane %v2405, 2
    %v2407 = vmax.f32 %v2405, %v2406
    %v2408 = vrot.slane %v2407, 1
    %v2409 = vmax.f32 %v2407, %v2408
    %v2410 = vrot.slane %v2361, 4
    %v2411 = vmax.f32 %v2361, %v2410
    %v2412 = vrot.slane %v2411, 2
    %v2413 = vmax.f32 %v2411, %v2412
    %v2414 = vrot.slane %v2413, 1
    %v2415 = vmax.f32 %v2413, %v2414
    %v2416 = vrot.slane %v2362, 4
    %v2417 = vmax.f32 %v2362, %v2416
    %v2418 = vrot.slane %v2417, 2
    %v2419 = vmax.f32 %v2417, %v2418
    %v2420 = vrot.slane %v2419, 1
    %v2421 = vmax.f32 %v2419, %v2420
    %v2422 = vrot.slane %v2363, 4
    %v2423 = vmax.f32 %v2363, %v2422
    %v2424 = vrot.slane %v2423, 2
    %v2425 = vmax.f32 %v2423, %v2424
    %v2426 = vrot.slane %v2425, 1
    %v2427 = vmax.f32 %v2425, %v2426
    %v2428 = vrot.slane %v2364, 4
    %v2429 = vmax.f32 %v2364, %v2428
    %v2430 = vrot.slane %v2429, 2
    %v2431 = vmax.f32 %v2429, %v2430
    %v2432 = vrot.slane %v2431, 1
    %v2433 = vmax.f32 %v2431, %v2432
    %v2434 = vrot.slane %v2365, 4
    %v2435 = vmax.f32 %v2365, %v2434
    %v2436 = vrot.slane %v2435, 2
    %v2437 = vmax.f32 %v2435, %v2436
    %v2438 = vrot.slane %v2437, 1
    %v2439 = vmax.f32 %v2437, %v2438
    %v2440 = vrot.slane %v2366, 4
    %v2441 = vmax.f32 %v2366, %v2440
    %v2442 = vrot.slane %v2441, 2
    %v2443 = vmax.f32 %v2441, %v2442
    %v2444 = vrot.slane %v2443, 1
    %v2445 = vmax.f32 %v2443, %v2444
    %v2446 = vrot.slane %v2367, 4
    %v2447 = vmax.f32 %v2367, %v2446
    %v2448 = vrot.slane %v2447, 2
    %v2449 = vmax.f32 %v2447, %v2448
    %v2450 = vrot.slane %v2449, 1
    %v2451 = vmax.f32 %v2449, %v2450
    %v2452 = vrot.slane %v2368, 4
    %v2453 = vmax.f32 %v2368, %v2452
    %v2454 = vrot.slane %v2453, 2
    %v2455 = vmax.f32 %v2453, %v2454
    %v2456 = vrot.slane %v2455, 1
    %v2457 = vmax.f32 %v2455, %v2456
    %v2458 = vrot.slane %v2369, 4
    %v2459 = vmax.f32 %v2369, %v2458
    %v2460 = vrot.slane %v2459, 2
    %v2461 = vmax.f32 %v2459, %v2460
    %v2462 = vrot.slane %v2461, 1
    %v2463 = vmax.f32 %v2461, %v2462
    %v2464 = vrot.slane %v2370, 4
    %v2465 = vmax.f32 %v2370, %v2464
    %v2466 = vrot.slane %v2465, 2
    %v2467 = vmax.f32 %v2465, %v2466
    %v2468 = vrot.slane %v2467, 1
    %v2469 = vmax.f32 %v2467, %v2468
    %v2470 = vrot.slane %v2371, 4
    %v2471 = vmax.f32 %v2371, %v2470
    %v2472 = vrot.slane %v2471, 2
    %v2473 = vmax.f32 %v2471, %v2472
    %v2474 = vrot.slane %v2473, 1
    %v2475 = vmax.f32 %v2473, %v2474
    %v2476 = vrot.slane %v2372, 4
    %v2477 = vmax.f32 %v2372, %v2476
    %v2478 = vrot.slane %v2477, 2
    %v2479 = vmax.f32 %v2477, %v2478
    %v2480 = vrot.slane %v2479, 1
    %v2481 = vmax.f32 %v2479, %v2480
    %v2482 = vrot.slane %v2373, 4
    %v2483 = vmax.f32 %v2373, %v2482
    %v2484 = vrot.slane %v2483, 2
    %v2485 = vmax.f32 %v2483, %v2484
    %v2486 = vrot.slane %v2485, 1
    %v2487 = vmax.f32 %v2485, %v2486
    %v2488 = vrot.slane %v2374, 4
    %v2489 = vmax.f32 %v2374, %v2488
    %v2490 = vrot.slane %v2489, 2
    %v2491 = vmax.f32 %v2489, %v2490
    %v2492 = vrot.slane %v2491, 1
    %v2493 = vmax.f32 %v2491, %v2492
    %v2494 = vrot.slane %v2375, 4
    %v2495 = vmax.f32 %v2375, %v2494
    %v2496 = vrot.slane %v2495, 2
    %v2497 = vmax.f32 %v2495, %v2496
    %v2498 = vrot.slane %v2497, 1
    %v2499 = vmax.f32 %v2497, %v2498
    %v2500 = vrot.slane %v2376, 4
    %v2501 = vmax.f32 %v2376, %v2500
    %v2502 = vrot.slane %v2501, 2
    %v2503 = vmax.f32 %v2501, %v2502
    %v2504 = vrot.slane %v2503, 1
    %v2505 = vmax.f32 %v2503, %v2504
    %v2506 = vrot.slane %v2377, 4
    %v2507 = vmax.f32 %v2377, %v2506
    %v2508 = vrot.slane %v2507, 2
    %v2509 = vmax.f32 %v2507, %v2508
    %v2510 = vrot.slane %v2509, 1
    %v2511 = vmax.f32 %v2509, %v2510
    %v2512 = vrot.slane %v2378, 4
    %v2513 = vmax.f32 %v2378, %v2512
    %v2514 = vrot.slane %v2513, 2
    %v2515 = vmax.f32 %v2513, %v2514
    %v2516 = vrot.slane %v2515, 1
    %v2517 = vmax.f32 %v2515, %v2516
    %v2518 = vrot.slane %v2379, 4
    %v2519 = vmax.f32 %v2379, %v2518
    %v2520 = vrot.slane %v2519, 2
    %v2521 = vmax.f32 %v2519, %v2520
    %v2522 = vrot.slane %v2521, 1
    %v2523 = vmax.f32 %v2521, %v2522
    %v2524 = vmax.f32 %v1174, %v2385
    %v2525 = vmax.f32 %v1180, %v2391
    %v2526 = vmax.f32 %v1186, %v2397
    %v2527 = vmax.f32 %v1192, %v2403
    %v2528 = vmax.f32 %v1198, %v2409
    %v2529 = vmax.f32 %v1204, %v2415
    %v2530 = vmax.f32 %v1210, %v2421
    %v2531 = vmax.f32 %v1216, %v2427
    %v2532 = vmax.f32 %v1222, %v2433
    %v2533 = vmax.f32 %v1228, %v2439
    %v2534 = vmax.f32 %v1234, %v2445
    %v2535 = vmax.f32 %v1240, %v2451
    %v2536 = vmax.f32 %v1246, %v2457
    %v2537 = vmax.f32 %v1252, %v2463
    %v2538 = vmax.f32 %v1258, %v2469
    %v2539 = vmax.f32 %v1264, %v2475
    %v2540 = vmax.f32 %v1270, %v2481
    %v2541 = vmax.f32 %v1276, %v2487
    %v2542 = vmax.f32 %v1282, %v2493
    %v2543 = vmax.f32 %v1288, %v2499
    %v2544 = vmax.f32 %v1294, %v2505
    %v2545 = vmax.f32 %v1300, %v2511
    %v2546 = vmax.f32 %v1306, %v2517
    %v2547 = vmax.f32 %v1312, %v2523
    %v2548 = vld [vmem:[%s3] sm:$0x7]
    %v2550 = vlaneseq
    %v2551 = vshrl.u32 %v2550, 7
    %v2552 = vsub.s32 0, %v2551
    %v2553 = vrot.slane %v2548, %v2552
    %v2554 = vlaneseq
    %v2555 = vshrl.u32 %v2554, 7
    %v2556 = vsub.s32 1, %v2555
    %v2557 = vrot.slane %v2548, %v2556
    %v2558 = vlaneseq
    %v2559 = vshrl.u32 %v2558, 7
    %v2560 = vsub.s32 2, %v2559
    %v2561 = vrot.slane %v2548, %v2560
    %v2565 = vadd.f32 %v2524, %v2553
    %v2566 = vadd.f32 %v2525, %v2557
    %v2567 = vadd.f32 %v2526, %v2561
    %v2568 = vadd.f32 %v2527, %v2553
    %v2569 = vadd.f32 %v2528, %v2557
    %v2570 = vadd.f32 %v2529, %v2561
    %v2571 = vadd.f32 %v2530, %v2553
    %v2572 = vadd.f32 %v2531, %v2557
    %v2573 = vadd.f32 %v2532, %v2561
    %v2574 = vadd.f32 %v2533, %v2553
    %v2575 = vadd.f32 %v2534, %v2557
    %v2576 = vadd.f32 %v2535, %v2561
    %v2577 = vadd.f32 %v2536, %v2553
    %v2578 = vadd.f32 %v2537, %v2557
    %v2579 = vadd.f32 %v2538, %v2561
    %v2580 = vadd.f32 %v2539, %v2553
    %v2581 = vadd.f32 %v2540, %v2557
    %v2582 = vadd.f32 %v2541, %v2561
    %v2583 = vadd.f32 %v2542, %v2553
    %v2584 = vadd.f32 %v2543, %v2557
    %v2585 = vadd.f32 %v2544, %v2561
    %v2586 = vadd.f32 %v2545, %v2553
    %v2587 = vadd.f32 %v2546, %v2557
    %v2588 = vadd.f32 %v2547, %v2561
    %v2589 = vmax.f32 %v2565, 0.0
    %v2590 = vmax.f32 %v2566, 0.0
    %v2591 = vmax.f32 %v2567, 0.0
    %v2592 = vmax.f32 %v2568, 0.0
    %v2593 = vmax.f32 %v2569, 0.0
    %v2594 = vmax.f32 %v2570, 0.0
    %v2595 = vmax.f32 %v2571, 0.0
    %v2596 = vmax.f32 %v2572, 0.0
    %v2597 = vmax.f32 %v2573, 0.0
    %v2598 = vmax.f32 %v2574, 0.0
    %v2599 = vmax.f32 %v2575, 0.0
    %v2600 = vmax.f32 %v2576, 0.0
    %v2601 = vmax.f32 %v2577, 0.0
    %v2602 = vmax.f32 %v2578, 0.0
    %v2603 = vmax.f32 %v2579, 0.0
    %v2604 = vmax.f32 %v2580, 0.0
    %v2605 = vmax.f32 %v2581, 0.0
    %v2606 = vmax.f32 %v2582, 0.0
    %v2607 = vmax.f32 %v2583, 0.0
    %v2608 = vmax.f32 %v2584, 0.0
    %v2609 = vmax.f32 %v2585, 0.0
    %v2610 = vmax.f32 %v2586, 0.0
    %v2611 = vmax.f32 %v2587, 0.0
    %v2612 = vmax.f32 %v2588, 0.0
    %v2613 = vpack.c.bf16 %v2589, %v2589
    %v2614 = vpack.c.bf16 %v2590, %v2590
    %v2615 = vpack.c.bf16 %v2591, %v2591
    %v2616 = vpack.c.bf16 %v2592, %v2592
    %v2617 = vpack.c.bf16 %v2593, %v2593
    %v2618 = vpack.c.bf16 %v2594, %v2594
    %v2619 = vpack.c.bf16 %v2595, %v2595
    %v2620 = vpack.c.bf16 %v2596, %v2596
    %v2621 = vpack.c.bf16 %v2597, %v2597
    %v2622 = vpack.c.bf16 %v2598, %v2598
    %v2623 = vpack.c.bf16 %v2599, %v2599
    %v2624 = vpack.c.bf16 %v2600, %v2600
    %v2625 = vpack.c.bf16 %v2601, %v2601
    %v2626 = vpack.c.bf16 %v2602, %v2602
    %v2627 = vpack.c.bf16 %v2603, %v2603
    %v2628 = vpack.c.bf16 %v2604, %v2604
    %v2629 = vpack.c.bf16 %v2605, %v2605
    %v2630 = vpack.c.bf16 %v2606, %v2606
    %v2631 = vpack.c.bf16 %v2607, %v2607
    %v2632 = vpack.c.bf16 %v2608, %v2608
    %v2633 = vpack.c.bf16 %v2609, %v2609
    %v2634 = vpack.c.bf16 %v2610, %v2610
    %v2635 = vpack.c.bf16 %v2611, %v2611
    %v2636 = vpack.c.bf16 %v2612, %v2612
    %v2637 = vld [vmem:[#allocation2] sm:$0xf]
    %v2638 = vld [vmem:[#allocation2 + $0x4] sm:$0xf]
    %v2639 = vld [vmem:[#allocation2 + $0x8] sm:$0xf]
    %v2640 = vld [vmem:[#allocation2 + $0xc] sm:$0xf]
    %v2641 = vld [vmem:[#allocation2 + $0x10] sm:$0xf]
    %v2642 = vld [vmem:[#allocation2 + $0x14] sm:$0xf]
    %v2643 = vld [vmem:[#allocation2 + $0x18] sm:$0xf]
    %v2644 = vld [vmem:[#allocation2 + $0x1c] sm:$0xf]
    %v2645 = vld [vmem:[#allocation2 + $0x20] sm:$0xf]
    %v2646 = vld [vmem:[#allocation2 + $0x24] sm:$0xf]
    %v2647 = vld [vmem:[#allocation2 + $0x28] sm:$0xf]
    %v2648 = vld [vmem:[#allocation2 + $0x2c] sm:$0xf]
    %v2649 = vld [vmem:[#allocation2 + $0x30] sm:$0xf]
    %v2650 = vld [vmem:[#allocation2 + $0x34] sm:$0xf]
    %v2651 = vld [vmem:[#allocation2 + $0x38] sm:$0xf]
    %v2652 = vld [vmem:[#allocation2 + $0x3c] sm:$0xf]
    %v2653 = vld [vmem:[#allocation2 + $0x40] sm:$0xf]
    %v2654 = vld [vmem:[#allocation2 + $0x44] sm:$0xf]
    %v2655 = vld [vmem:[#allocation2 + $0x48] sm:$0xf]
    %v2656 = vld [vmem:[#allocation2 + $0x4c] sm:$0xf]
    %v2657 = vld [vmem:[#allocation2 + $0x50] sm:$0xf]
    %v2658 = vld [vmem:[#allocation2 + $0x54] sm:$0xf]
    %v2659 = vld [vmem:[#allocation2 + $0x58] sm:$0xf]
    %v2660 = vld [vmem:[#allocation2 + $0x5c] sm:$0xf]
    %v2661 = vld [vmem:[#allocation2 + $0x60] sm:$0xf]
    %v2662 = vld [vmem:[#allocation2 + $0x64] sm:$0xf]
    %v2663 = vld [vmem:[#allocation2 + $0x68] sm:$0xf]
    %v2664 = vld [vmem:[#allocation2 + $0x6c] sm:$0xf]
    %v2665 = vld [vmem:[#allocation2 + $0x70] sm:$0xf]
    %v2666 = vld [vmem:[#allocation2 + $0x74] sm:$0xf]
    %v2667 = vld [vmem:[#allocation2 + $0x78] sm:$0xf]
    %v2668 = vld [vmem:[#allocation2 + $0x7c] sm:$0xf]
    %v2669 = vld [vmem:[#allocation2 + $0x80] sm:$0xf]
    %v2670 = vld [vmem:[#allocation2 + $0x84] sm:$0xf]
    %v2671 = vld [vmem:[#allocation2 + $0x88] sm:$0xf]
    %v2672 = vld [vmem:[#allocation2 + $0x8c] sm:$0xf]
    %v2673 = vld [vmem:[#allocation2 + $0x90] sm:$0xf]
    %v2674 = vld [vmem:[#allocation2 + $0x94] sm:$0xf]
    %v2675 = vld [vmem:[#allocation2 + $0x98] sm:$0xf]
    %v2676 = vld [vmem:[#allocation2 + $0x9c] sm:$0xf]
    %v2677 = vld [vmem:[#allocation2 + $0xa0] sm:$0xf]
    %v2678 = vld [vmem:[#allocation2 + $0xa4] sm:$0xf]
    %v2679 = vld [vmem:[#allocation2 + $0xa8] sm:$0xf]
    %v2680 = vld [vmem:[#allocation2 + $0xac] sm:$0xf]
    %v2681 = vld [vmem:[#allocation2 + $0xb0] sm:$0xf]
    %v2682 = vld [vmem:[#allocation2 + $0xb4] sm:$0xf]
    %v2683 = vld [vmem:[#allocation2 + $0xb8] sm:$0xf]
    %v2684 = vld [vmem:[#allocation2 + $0xbc] sm:$0xf]
    %v2685 = vld [vmem:[%s5] sm:$0x1]
    %v2687 = vlaneseq
    %v2688 = vshrl.u32 %v2687, 7
    %v2689 = vsub.s32 0, %v2688
    %v2690 = vrot.slane %v2685, %v2689
    %v2716 = vunpack.c.l.b16 %v2613
    %v2717 = vunpack.c.l.b16 %v2614
    %v2718 = vunpack.c.l.b16 %v2615
    %v2719 = vunpack.c.l.b16 %v2616
    %v2720 = vunpack.c.l.b16 %v2617
    %v2721 = vunpack.c.l.b16 %v2618
    %v2722 = vunpack.c.l.b16 %v2619
    %v2723 = vunpack.c.l.b16 %v2620
    %v2724 = vunpack.c.l.b16 %v2621
    %v2725 = vunpack.c.l.b16 %v2622
    %v2726 = vunpack.c.l.b16 %v2623
    %v2727 = vunpack.c.l.b16 %v2624
    %v2728 = vunpack.c.l.b16 %v2625
    %v2729 = vunpack.c.l.b16 %v2626
    %v2730 = vunpack.c.l.b16 %v2627
    %v2731 = vunpack.c.l.b16 %v2628
    %v2732 = vunpack.c.l.b16 %v2629
    %v2733 = vunpack.c.l.b16 %v2630
    %v2734 = vunpack.c.l.b16 %v2631
    %v2735 = vunpack.c.l.b16 %v2632
    %v2736 = vunpack.c.l.b16 %v2633
    %v2737 = vunpack.c.l.b16 %v2634
    %v2738 = vunpack.c.l.b16 %v2635
    %v2739 = vunpack.c.l.b16 %v2636
    %v2740 = vrot.slane %v2719, 7
    %vm2741 = vcmask 1041409
    %v2742 = vsel %vm2741, %v2740, %v2716
    %v2743 = vrot.slane %v2722, 6
    %vm2744 = vcmask 1042434
    %v2745 = vsel %vm2744, %v2743, %v2742
    %v2746 = vrot.slane %v2725, 5
    %vm2747 = vcmask 1043459
    %v2748 = vsel %vm2747, %v2746, %v2745
    %v2749 = vrot.slane %v2728, 4
    %vm2750 = vcmask 1044484
    %v2751 = vsel %vm2750, %v2749, %v2748
    %v2752 = vrot.slane %v2731, 3
    %vm2753 = vcmask 1045509
    %v2754 = vsel %vm2753, %v2752, %v2751
    %v2755 = vrot.slane %v2734, 2
    %vm2756 = vcmask 1046534
    %v2757 = vsel %vm2756, %v2755, %v2754
    %v2758 = vrot.slane %v2737, 1
    %vm2759 = vcmask 1047559
    %v2760 = vsel %vm2759, %v2758, %v2757
    %v2761 = vrot.slane %v2720, 7
    %v2762 = vsel %vm2741, %v2761, %v2717
    %v2763 = vrot.slane %v2723, 6
    %v2764 = vsel %vm2744, %v2763, %v2762
    %v2765 = vrot.slane %v2726, 5
    %v2766 = vsel %vm2747, %v2765, %v2764
    %v2767 = vrot.slane %v2729, 4
    %v2768 = vsel %vm2750, %v2767, %v2766
    %v2769 = vrot.slane %v2732, 3
    %v2770 = vsel %vm2753, %v2769, %v2768
    %v2771 = vrot.slane %v2735, 2
    %v2772 = vsel %vm2756, %v2771, %v2770
    %v2773 = vrot.slane %v2738, 1
    %v2774 = vsel %vm2759, %v2773, %v2772
    %v2775 = vrot.slane %v2721, 7
    %v2776 = vsel %vm2741, %v2775, %v2718
    %v2777 = vrot.slane %v2724, 6
    %v2778 = vsel %vm2744, %v2777, %v2776
    %v2779 = vrot.slane %v2727, 5
    %v2780 = vsel %vm2747, %v2779, %v2778
    %v2781 = vrot.slane %v2730, 4
    %v2782 = vsel %vm2750, %v2781, %v2780
    %v2783 = vrot.slane %v2733, 3
    %v2784 = vsel %vm2753, %v2783, %v2782
    %v2785 = vrot.slane %v2736, 2
    %v2786 = vsel %vm2756, %v2785, %v2784
    %v2787 = vrot.slane %v2739, 1
    %v2788 = vsel %vm2759, %v2787, %v2786
    %v2789 = vpack.c.b16 %v2760, %v2760
    %v2790 = vpack.c.b16 %v2774, %v2774
    %v2791 = vpack.c.b16 %v2788, %v2788
    %v2843 = vunpack.c.l.b16 %v2637
    %v2844 = vunpack.c.l.b16 %v2638
    %v2845 = vunpack.c.l.b16 %v2639
    %v2846 = vunpack.c.l.b16 %v2640
    %v2847 = vunpack.c.l.b16 %v2641
    %v2848 = vunpack.c.l.b16 %v2642
    %v2849 = vunpack.c.l.b16 %v2643
    %v2850 = vunpack.c.l.b16 %v2644
    %v2851 = vunpack.c.l.b16 %v2645
    %v2852 = vunpack.c.l.b16 %v2646
    %v2853 = vunpack.c.l.b16 %v2647
    %v2854 = vunpack.c.l.b16 %v2648
    %v2855 = vunpack.c.l.b16 %v2649
    %v2856 = vunpack.c.l.b16 %v2650
    %v2857 = vunpack.c.l.b16 %v2651
    %v2858 = vunpack.c.l.b16 %v2652
    %v2859 = vunpack.c.l.b16 %v2653
    %v2860 = vunpack.c.l.b16 %v2654
    %v2861 = vunpack.c.l.b16 %v2655
    %v2862 = vunpack.c.l.b16 %v2656
    %v2863 = vunpack.c.l.b16 %v2657
    %v2864 = vunpack.c.l.b16 %v2658
    %v2865 = vunpack.c.l.b16 %v2659
    %v2866 = vunpack.c.l.b16 %v2660
    %v2867 = vunpack.c.l.b16 %v2661
    %v2868 = vunpack.c.l.b16 %v2662
    %v2869 = vunpack.c.l.b16 %v2663
    %v2870 = vunpack.c.l.b16 %v2664
    %v2871 = vunpack.c.l.b16 %v2665
    %v2872 = vunpack.c.l.b16 %v2666
    %v2873 = vunpack.c.l.b16 %v2667
    %v2874 = vunpack.c.l.b16 %v2668
    %v2875 = vunpack.c.l.b16 %v2669
    %v2876 = vunpack.c.l.b16 %v2670
    %v2877 = vunpack.c.l.b16 %v2671
    %v2878 = vunpack.c.l.b16 %v2672
    %v2879 = vunpack.c.l.b16 %v2673
    %v2880 = vunpack.c.l.b16 %v2674
    %v2881 = vunpack.c.l.b16 %v2675
    %v2882 = vunpack.c.l.b16 %v2676
    %v2883 = vunpack.c.l.b16 %v2677
    %v2884 = vunpack.c.l.b16 %v2678
    %v2885 = vunpack.c.l.b16 %v2679
    %v2886 = vunpack.c.l.b16 %v2680
    %v2887 = vunpack.c.l.b16 %v2681
    %v2888 = vunpack.c.l.b16 %v2682
    %v2889 = vunpack.c.l.b16 %v2683
    %v2890 = vunpack.c.l.b16 %v2684
    %v2891 = vpack.c.b16 %v2844, %v2843
    %v2892 = vpack.c.b16 %v2846, %v2845
    %v2893 = vpack.c.b16 %v2848, %v2847
    %v2894 = vpack.c.b16 %v2850, %v2849
    %v2895 = vpack.c.b16 %v2852, %v2851
    %v2896 = vpack.c.b16 %v2854, %v2853
    %v2897 = vpack.c.b16 %v2856, %v2855
    %v2898 = vpack.c.b16 %v2858, %v2857
    %v2899 = vpack.c.b16 %v2860, %v2859
    %v2900 = vpack.c.b16 %v2862, %v2861
    %v2901 = vpack.c.b16 %v2864, %v2863
    %v2902 = vpack.c.b16 %v2866, %v2865
    %v2903 = vpack.c.b16 %v2868, %v2867
    %v2904 = vpack.c.b16 %v2870, %v2869
    %v2905 = vpack.c.b16 %v2872, %v2871
    %v2906 = vpack.c.b16 %v2874, %v2873
    %v2907 = vpack.c.b16 %v2876, %v2875
    %v2908 = vpack.c.b16 %v2878, %v2877
    %v2909 = vpack.c.b16 %v2880, %v2879
    %v2910 = vpack.c.b16 %v2882, %v2881
    %v2911 = vpack.c.b16 %v2884, %v2883
    %v2912 = vpack.c.b16 %v2886, %v2885
    %v2913 = vpack.c.b16 %v2888, %v2887
    %v2914 = vpack.c.b16 %v2890, %v2889
    %2939 = vmatprep.subr.bf16.mxu0 0
    %2940 = vmatpush1.bf16.msra.mxu0 %v2891
    %2941 = vmatprep.subr.bf16.mxu0 0
    %2942 = vmatpush1.bf16.msra.mxu0 %v2892
    %2943 = vmatprep.subr.bf16.mxu0 0
    %2944 = vmatpush1.bf16.msra.mxu0 %v2893
    %2945 = vmatprep.subr.bf16.mxu0 0
    %2946 = vmatpush1.bf16.msra.mxu0 %v2894
    %2947 = vmatprep.subr.bf16.mxu0 0
    %2948 = vmatpush1.bf16.msra.mxu0 %v2895
    %2949 = vmatprep.subr.bf16.mxu0 0
    %2950 = vmatpush1.bf16.msra.mxu0 %v2896
    %2951 = vmatprep.subr.bf16.mxu0 0
    %2952 = vmatpush1.bf16.msra.mxu0 %v2897
    %2953 = vmatprep.subr.bf16.mxu0 0
    %2954 = vmatpush1.bf16.msra.mxu0 %v2898
    %2955 = vmatprep.subr.bf16.mxu0 0
    %2956 = vmatpush1.bf16.msra.mxu0 %v2899
    %2957 = vmatprep.subr.bf16.mxu0 0
    %2958 = vmatpush1.bf16.msra.mxu0 %v2900
    %2959 = vmatprep.subr.bf16.mxu0 0
    %2960 = vmatpush1.bf16.msra.mxu0 %v2901
    %2961 = vmatprep.subr.bf16.mxu0 0
    %2962 = vmatpush1.bf16.msra.mxu0 %v2902
    %2963 = vmatprep.subr.bf16.mxu0 0
    %2964 = vmatpush1.bf16.msra.mxu0 %v2903
    %2965 = vmatprep.subr.bf16.mxu0 0
    %2966 = vmatpush1.bf16.msra.mxu0 %v2904
    %2967 = vmatprep.subr.bf16.mxu0 0
    %2968 = vmatpush1.bf16.msra.mxu0 %v2905
    %2969 = vmatprep.subr.bf16.mxu0 0
    %2970 = vmatpush1.bf16.msra.mxu0 %v2906
    %2971 = vmatprep.mubr.bf16.mxu0 %v2790
    %2972 = vmatmul.mubr.bf16.gmra.mrb[0].mxu0 %v2789
    %v2973 = vpop.f32.mrb[0].mxu0
    %v2974 = vadd.f32 %v2690, %v2973
    %v2975 = vpop.f32.mrb[0].mxu0
    %v2976 = vpop.f32.mrb[0].mxu0
    %v2977 = vpop.f32.mrb[0].mxu0
    %2978 = vdwg.mxu0
    %2979 = vmatprep.subr.bf16.mxu0 0
    %2980 = vmatpush1.bf16.msra.mxu0 %v2907
    %2981 = vmatprep.subr.bf16.mxu0 0
    %2982 = vmatpush1.bf16.msra.mxu0 %v2908
    %2983 = vmatprep.subr.bf16.mxu0 0
    %2984 = vmatpush1.bf16.msra.mxu0 %v2909
    %2985 = vmatprep.subr.bf16.mxu0 0
    %2986 = vmatpush1.bf16.msra.mxu0 %v2910
    %2987 = vmatprep.subr.bf16.mxu0 0
    %2988 = vmatpush1.bf16.msra.mxu0 %v2911
    %2989 = vmatprep.subr.bf16.mxu0 0
    %2990 = vmatpush1.bf16.msra.mxu0 %v2912
    %2991 = vmatprep.subr.bf16.mxu0 0
    %2992 = vmatpush1.bf16.msra.mxu0 %v2913
    %2993 = vmatprep.subr.bf16.mxu0 0
    %2994 = vmatpush1.bf16.msra.mxu0 %v2914
    %2995 = vmatprep.subr.bf16.mxu0 0
    %2996 = vmatpush1.bf16.msra.mxu0 0
    %2997 = vmatprep.subr.bf16.mxu0 0
    %2998 = vmatpush1.bf16.msra.mxu0 0
    %2999 = vmatprep.subr.bf16.mxu0 0
    %3000 = vmatpush1.bf16.msra.mxu0 0
    %3001 = vmatprep.subr.bf16.mxu0 0
    %3002 = vmatpush1.bf16.msra.mxu0 0
    %3003 = vmatprep.subr.bf16.mxu0 0
    %3004 = vmatpush1.bf16.msra.mxu0 0
    %3005 = vmatprep.subr.bf16.mxu0 0
    %3006 = vmatpush1.bf16.msra.mxu0 0
    %3007 = vmatprep.subr.bf16.mxu0 0
    %3008 = vmatpush1.bf16.msra.mxu0 0
    %3009 = vmatprep.subr.bf16.mxu0 0
    %3010 = vmatpush1.bf16.msra.mxu0 0
    %3011 = vmatprep.mubr.bf16.mxu0 0
    %3012 = vmatmul.mubr.bf16.gmra.mrb[0].mxu0 %v2791
    %v3013 = vpop.f32.mrb[0].mxu0
    %v3014 = vadd.f32 %v2974, %v3013
    %v3015 = vpop.f32.mrb[0].mxu0
    %v3016 = vpop.f32.mrb[0].mxu0
    %v3017 = vpop.f32.mrb[0].mxu0
    %3018 = vdwg.mxu0
    %3019 = vst [vmem:[#allocation5] sm:$0xff] %v3014
    // Predicated region
    $region30: #{tpu_custom_call.1} parent=1 // pred_check
      _
    $region31: #{tpu_custom_call.1} parent=1 // pred_check_branch
      %3021 = sbr.rel (0) target = $region33
    $region32: #{tpu_custom_call.1} parent=1 // pred_region
      %s3023 = ssub.s32 128, 128
      %3024 = vsyncadd [#allocation4], %s3023
      %s3026 = sshll.u32 [#allocation5], 4
      %s3027 = int_to_ptr.vmem [resolvable:$true] %s3026
      %3029 = dma.vmem_to_hbm [thread:$0]  %s3027, 128, %s6, [#allocation4]
    $region33: #{tpu_custom_call.1} parent=1 // pred_fallthru
      _
    // Predicated region
    $region34: #{tpu_custom_call.1} parent=1 // pred_check
      _
    $region35: #{tpu_custom_call.1} parent=1 // pred_check_branch
      %3031 = sbr.rel (0) target = $region37
    $region36: #{tpu_custom_call.1} parent=1 // pred_region
      %3032 = dma.done [#allocation4], 128
    $region37: #{tpu_custom_call.1} parent=1 // pred_fallthru
      _
    %3033 = vsyncpa [#allocation3], 1
    %3034 = vsyncpa [#allocation4], 1

</llo_original>
